<compile_context>
chip_gen: v7x
topology: tpu7x:2x2x1
jax: 0.10.0
libtpu: 0.0.40
codegen_flags: <defaults>
</compile_context>

<pallas_src>
import jax
import jax.numpy as jnp
from jax.experimental import pallas as pl
from jax.experimental.pallas import tpu as pltpu

BN_EPS = 1e-5
F_PAD = 128           # input features zero-padded to a lane-dense width
MAX_TILE_B = 2048     # batch columns per grid step (cap)

# Packed tail (fc3..fc7) layout inside the (128,128) weight slab / (128,1) bias
# column: (row_offset, padded_out_dim, in_dim). fc7's out dim (1) is padded to 8
# zero rows so every matmul keeps m >= 8; only row 0 of the final result is real.
TAIL = ((0, 64, 128), (64, 32, 64), (96, 16, 32), (112, 8, 16), (120, 8, 8))


def netplus_kernel(x_ref, w1_ref, w2_ref, wt_ref, b1_ref, b2_ref, bt_ref, o_ref):
    f32 = jnp.float32
    bf16 = jnp.bfloat16

    # fc1 (+ folded bn1) -> relu.  Transposed orientation:
    # (256, F_PAD) @ (F_PAD, TILE_B) -> (256, TILE_B).  Dropout = identity (eval).
    h = jnp.dot(w1_ref[...], x_ref[...], preferred_element_type=f32)
    h = jnp.maximum(h + b1_ref[...], 0.0)

    # fc2 (+ folded bn2) -> relu: (128, 256) @ (256, TILE_B) -> (128, TILE_B).
    h = jnp.dot(w2_ref[...], h.astype(bf16), preferred_element_type=f32)
    h = jnp.maximum(h + b2_ref[...], 0.0)

    # Tail fc3..fc7: serial chain, bf16 operands / f32 accumulation on the MXU.
    # Weight slab is f32 in VMEM; the tiny slices are cast per step (negligible).
    ht = h
    n_tail = len(TAIL)
    for n, (off, o, k) in enumerate(TAIL):
        w = wt_ref[off:off + o, 0:k].astype(bf16)
        ht = jnp.dot(w, ht.astype(bf16),
                     preferred_element_type=f32) + bt_ref[off:off + o, :]
        if n < n_tail - 1:                                  # relu on fc3..fc6
            ht = jnp.maximum(ht, 0.0)

    # ht is (8, TILE_B): row 0 = fc7 output, rows 1..7 are exactly zero because
    # their weight rows and biases are zero.  Full-slab store = unmasked vst.
    o_ref[...] = ht.astype(o_ref.dtype)


def init_params(key, input_shape, s_shape=2):
    """Raw parameters, PyTorch layout: fc{i}_w is (out, in), fc{i}_b is (out,)."""
    dims = [input_shape + s_shape, 256, 128, 64, 32, 16, 8, 1]
    keys = iter(jax.random.split(key, 32))
    p = {}
    for i in range(len(dims) - 1):
        fan_in, fan_out = dims[i], dims[i + 1]
        bound = float(fan_in) ** -0.5
        p[f"fc{i+1}_w"] = jax.random.uniform(next(keys), (fan_out, fan_in),
                                             jnp.float32, -bound, bound)
        p[f"fc{i+1}_b"] = jax.random.uniform(next(keys), (fan_out,),
                                             jnp.float32, -bound, bound)
    # Non-trivial BN running stats so the test actually exercises the BN math.
    for idx, f in ((1, 256), (2, 128)):
        p[f"bn{idx}_g"] = jax.random.uniform(next(keys), (f,), jnp.float32, 0.5, 1.5)
        p[f"bn{idx}_be"] = 0.2 * jax.random.normal(next(keys), (f,), jnp.float32)
        p[f"bn{idx}_rm"] = 0.2 * jax.random.normal(next(keys), (f,), jnp.float32)
        p[f"bn{idx}_rv"] = jax.random.uniform(next(keys), (f,), jnp.float32, 0.5, 1.5)
    return p


def fold_and_pack_params(p, in_features):
    """One-time transform: fold eval-mode BN into fc1/fc2, pad + pack params.

    Weights stay in native PyTorch (out, in) layout (transposed-orientation
    kernel).  bf16 rounding of fc1/fc2 weights is an intentional precision
    tradeoff for the MXU bf16 path (documented; fine for eval inference).
    """
    assert in_features <= F_PAD
    f32 = jnp.float32
    bf16 = jnp.bfloat16
    # fc1 + bn1 folded, (256, F_PAD) bf16; columns >= in_features are zero.
    s1 = p["bn1_g"] * jax.lax.rsqrt(p["bn1_rv"] + BN_EPS)
    w1 = jnp.zeros((256, F_PAD), f32).at[:, :in_features].set(p["fc1_w"] * s1[:, None])
    b1 = ((p["fc1_b"] - p["bn1_rm"]) * s1 + p["bn1_be"]).reshape(256, 1)
    # fc2 + bn2 folded, (128, 256) bf16.
    s2 = p["bn2_g"] * jax.lax.rsqrt(p["bn2_rv"] + BN_EPS)
    w2 = p["fc2_w"] * s2[:, None]
    b2 = ((p["fc2_b"] - p["bn2_rm"]) * s2 + p["bn2_be"]).reshape(128, 1)
    # fc3..fc7 ((out, in) layout) packed into one f32 slab + one bias column.
    wtail = jnp.zeros((128, 128), f32)
    btail = jnp.zeros((128, 1), f32)
    off = 0
    for i in (3, 4, 5, 6, 7):
        w, b = p[f"fc{i}_w"], p[f"fc{i}_b"]
        o, k = w.shape
        wtail = wtail.at[off:off + o, :k].set(w)
        btail = btail.at[off:off + o, 0].set(b)
        off += o
    return (w1.astype(bf16), w2.astype(bf16), wtail, b1, b2, btail)


def _choose_tile_b(batch):
    """Big tiles amortize per-step overhead; keep >= 2 grid steps once the batch
    allows so v7x's second TensorCore gets work (no-op on v5e/v6e)."""
    t = pl.cdiv(batch, 2)
    t = pl.cdiv(t, 256) * 256
    return max(256, min(MAX_TILE_B, t))


def netplus_forward(x, packed):
    """x: (B, in_features) float32.  Returns (B, 1) float32."""
    w1, w2, wtail, b1, b2, btail = packed
    B, fin = x.shape
    tile_b = _choose_tile_b(B)
    n_tiles = pl.cdiv(B, tile_b)
    b_pad = n_tiles * tile_b
    # Single fused bf16 pad + transpose: x lands in HBM as (F_PAD, b_pad) bf16.
    xt = jnp.pad(x.astype(jnp.bfloat16),
                 ((0, b_pad - B), (0, F_PAD - fin))).T

    out = pl.pallas_call(
        netplus_kernel,
        out_shape=jax.ShapeDtypeStruct((8, b_pad), jnp.float32),
        grid_spec=pltpu.PrefetchScalarGridSpec(
            num_scalar_prefetch=0,
            grid=(n_tiles,),
            in_specs=[
                pl.BlockSpec((F_PAD, tile_b), lambda i: (0, i)),  # x tile
                pl.BlockSpec(w1.shape, lambda i: (0, 0)),         # resident weights
                pl.BlockSpec(w2.shape, lambda i: (0, 0)),
                pl.BlockSpec(wtail.shape, lambda i: (0, 0)),
                pl.BlockSpec(b1.shape, lambda i: (0, 0)),
                pl.BlockSpec(b2.shape, lambda i: (0, 0)),
                pl.BlockSpec(btail.shape, lambda i: (0, 0)),
            ],
            out_specs=pl.BlockSpec((8, tile_b), lambda i: (0, i)),
        ),
        compiler_params=pltpu.CompilerParams(
            dimension_semantics=("parallel",)),
    )(xt, w1, w2, wtail, b1, b2, btail)
    # Padded batch columns carry bias-propagated garbage; slice them off here.
    return out[0, :B].reshape(B, 1)


def netplus_reference(x, p):
    """Pure-JAX f32 eval-mode forward of the original module (true semantics)."""
    def lin(h, i):
        return h @ p[f"fc{i}_w"].T + p[f"fc{i}_b"]
    h = lin(x, 1)
    h = (h - p["bn1_rm"]) * jax.lax.rsqrt(p["bn1_rv"] + BN_EPS) * p["bn1_g"] + p["bn1_be"]
    h = jnp.maximum(h, 0.0)
    h = lin(h, 2)
    h = (h - p["bn2_rm"]) * jax.lax.rsqrt(p["bn2_rv"] + BN_EPS) * p["bn2_g"] + p["bn2_be"]
    h = jnp.maximum(h, 0.0)
    for i in (3, 4, 5, 6):
        h = jnp.maximum(lin(h, i), 0.0)
    return lin(h, 7)                                   # dropout identity (eval)


def netplus_matched_reference(x, packed):
    """Pure-JAX mirror of the kernel math (same folding / padding / bf16 casts)."""
    w1, w2, wtail, b1, b2, btail = packed
    B, fin = x.shape
    f32, bf16 = jnp.float32, jnp.bfloat16
    xt = jnp.pad(x.astype(bf16), ((0, 0), (0, F_PAD - fin))).T
    h = jnp.dot(w1, xt, preferred_element_type=f32)
    h = jnp.maximum(h + b1, 0.0)
    h = jnp.dot(w2, h.astype(bf16), preferred_element_type=f32)
    h = jnp.maximum(h + b2, 0.0)
    ht = h
    for n, (off, o, k) in enumerate(TAIL):
        ht = jnp.dot(wtail[off:off + o, :k].astype(bf16), ht.astype(bf16),
                     preferred_element_type=f32) + btail[off:off + o, :]
        if n < len(TAIL) - 1:
            ht = jnp.maximum(ht, 0.0)
    return ht[0:1, :].T                                 # (B, 1)


if __name__ == "__main__":
    key = jax.random.PRNGKey(0)
    k_param, k_x = jax.random.split(key)

    input_shape = 32     # feature dim of x minus the s_shape part
    s_shape = 2
    batch = 8

    params = init_params(k_param, input_shape, s_shape)
    packed = fold_and_pack_params(params, input_shape + s_shape)
    x = jax.random.normal(k_x, (batch, input_shape + s_shape), jnp.float32)

    y = jax.block_until_ready(netplus_forward(x, packed))
    assert y.shape == (batch, 1), y.shape

    # Tight check against a pure-JAX mirror of the exact kernel math.
    y_match = netplus_matched_reference(x, packed)
    assert jnp.allclose(y, y_match, atol=2e-3, rtol=2e-3), (
        float(jnp.max(jnp.abs(y - y_match))))

    # Looser check against the full-f32 eval-mode module semantics
    # (difference comes from bf16 operands on every matmul).
    y_ref = netplus_reference(x, params)
    assert jnp.allclose(y, y_ref, atol=5e-2, rtol=5e-2), (
        float(jnp.max(jnp.abs(y - y_ref))))

    print("KERNEL_OK")
</pallas_src>

<mosaic_0001>
module attributes {stable_mosaic.version = 11 : i64} {
  func.func @netplus_kernel(%arg0: i32, %arg1: memref<128x256xbf16, #tpu.memory_space<vmem>>, %arg2: memref<256x128xbf16, #tpu.memory_space<vmem>>, %arg3: memref<128x256xbf16, #tpu.memory_space<vmem>>, %arg4: memref<128x128xf32, #tpu.memory_space<vmem>>, %arg5: memref<256x1xf32, #tpu.memory_space<vmem>>, %arg6: memref<128x1xf32, #tpu.memory_space<vmem>>, %arg7: memref<128x1xf32, #tpu.memory_space<vmem>>, %arg8: memref<8x256xf32, #tpu.memory_space<vmem>>) attributes {dimension_semantics = [#tpu.dimension_semantics<parallel>], iteration_bounds = array<i64: 1>, scalar_prefetch = 0 : i64, scratch_operands = 0 : i64, tpu.core_type = #tpu.core_type<tc>, window_params = [{transform_indices = @transform_0, window_bounds = array<i64: 128, 256>}, {pipeline_mode = #tpu.pipeline_mode<synchronous>, transform_indices = @transform_1, window_bounds = array<i64: 256, 128>}, {pipeline_mode = #tpu.pipeline_mode<synchronous>, transform_indices = @transform_2, window_bounds = array<i64: 128, 256>}, {pipeline_mode = #tpu.pipeline_mode<synchronous>, transform_indices = @transform_3, window_bounds = array<i64: 128, 128>}, {pipeline_mode = #tpu.pipeline_mode<synchronous>, transform_indices = @transform_4, window_bounds = array<i64: 256, 1>}, {pipeline_mode = #tpu.pipeline_mode<synchronous>, transform_indices = @transform_5, window_bounds = array<i64: 128, 1>}, {pipeline_mode = #tpu.pipeline_mode<synchronous>, transform_indices = @transform_6, window_bounds = array<i64: 128, 1>}, {transform_indices = @transform_7, window_bounds = array<i64: 8, 256>}]} {
    %c0 = arith.constant 0 : index
    %c0_0 = arith.constant 0 : index
    %0 = vector.load %arg2[%c0, %c0_0] : memref<256x128xbf16, #tpu.memory_space<vmem>>, vector<256x128xbf16>
    %c0_1 = arith.constant 0 : index
    %c0_2 = arith.constant 0 : index
    %1 = vector.load %arg1[%c0_1, %c0_2] : memref<128x256xbf16, #tpu.memory_space<vmem>>, vector<128x256xbf16>
    %cst = arith.constant dense<0.000000e+00> : vector<256x256xf32>
    %2 = tpu.matmul %0, %1, %cst {dimension_numbers = #tpu.dot_dimension_numbers<[1], [0], [0], [1], [0, 0, 1, 1], [], []>} : vector<256x128xbf16>, vector<128x256xbf16>, vector<256x256xf32> -> vector<256x256xf32>
    %c0_3 = arith.constant 0 : index
    %c0_4 = arith.constant 0 : index
    %3 = vector.load %arg5[%c0_3, %c0_4] : memref<256x1xf32, #tpu.memory_space<vmem>>, vector<256x1xf32>
    %4 = vector.broadcast %3 : vector<256x1xf32> to vector<256x256xf32>
    %5 = arith.addf %2, %4 : vector<256x256xf32>
    %cst_5 = arith.constant 0.000000e+00 : f32
    %6 = vector.broadcast %cst_5 : f32 to vector<256x256xf32>
    %7 = arith.maximumf %5, %6 : vector<256x256xf32>
    %c0_6 = arith.constant 0 : index
    %c0_7 = arith.constant 0 : index
    %8 = vector.load %arg3[%c0_6, %c0_7] : memref<128x256xbf16, #tpu.memory_space<vmem>>, vector<128x256xbf16>
    %9 = arith.truncf %7 : vector<256x256xf32> to vector<256x256xbf16>
    %cst_8 = arith.constant dense<0.000000e+00> : vector<128x256xf32>
    %10 = tpu.matmul %8, %9, %cst_8 {dimension_numbers = #tpu.dot_dimension_numbers<[1], [0], [0], [1], [0, 0, 1, 1], [], []>} : vector<128x256xbf16>, vector<256x256xbf16>, vector<128x256xf32> -> vector<128x256xf32>
    %c0_9 = arith.constant 0 : index
    %c0_10 = arith.constant 0 : index
    %11 = vector.load %arg6[%c0_9, %c0_10] : memref<128x1xf32, #tpu.memory_space<vmem>>, vector<128x1xf32>
    %12 = vector.broadcast %11 : vector<128x1xf32> to vector<128x256xf32>
    %13 = arith.addf %10, %12 : vector<128x256xf32>
    %cst_11 = arith.constant 0.000000e+00 : f32
    %14 = vector.broadcast %cst_11 : f32 to vector<128x256xf32>
    %15 = arith.maximumf %13, %14 : vector<128x256xf32>
    %c0_12 = arith.constant 0 : index
    %c0_13 = arith.constant 0 : index
    %16 = vector.load %arg4[%c0_12, %c0_13] : memref<128x128xf32, #tpu.memory_space<vmem>>, vector<64x128xf32>
    %17 = arith.truncf %16 : vector<64x128xf32> to vector<64x128xbf16>
    %18 = arith.truncf %15 : vector<128x256xf32> to vector<128x256xbf16>
    %cst_14 = arith.constant dense<0.000000e+00> : vector<64x256xf32>
    %19 = tpu.matmul %17, %18, %cst_14 {dimension_numbers = #tpu.dot_dimension_numbers<[1], [0], [0], [1], [0, 0, 1, 1], [], []>} : vector<64x128xbf16>, vector<128x256xbf16>, vector<64x256xf32> -> vector<64x256xf32>
    %c0_15 = arith.constant 0 : index
    %c0_16 = arith.constant 0 : index
    %20 = vector.load %arg7[%c0_15, %c0_16] : memref<128x1xf32, #tpu.memory_space<vmem>>, vector<64x1xf32>
    %21 = vector.broadcast %20 : vector<64x1xf32> to vector<64x256xf32>
    %22 = arith.addf %19, %21 : vector<64x256xf32>
    %cst_17 = arith.constant 0.000000e+00 : f32
    %23 = vector.broadcast %cst_17 : f32 to vector<64x256xf32>
    %24 = arith.maximumf %22, %23 : vector<64x256xf32>
    %c64 = arith.constant 64 : index
    %c0_18 = arith.constant 0 : index
    %25 = vector.load %arg4[%c64, %c0_18] : memref<128x128xf32, #tpu.memory_space<vmem>>, vector<32x64xf32>
    %26 = arith.truncf %25 : vector<32x64xf32> to vector<32x64xbf16>
    %27 = arith.truncf %24 : vector<64x256xf32> to vector<64x256xbf16>
    %cst_19 = arith.constant dense<0.000000e+00> : vector<32x256xf32>
    %28 = tpu.matmul %26, %27, %cst_19 {dimension_numbers = #tpu.dot_dimension_numbers<[1], [0], [0], [1], [0, 0, 1, 1], [], []>} : vector<32x64xbf16>, vector<64x256xbf16>, vector<32x256xf32> -> vector<32x256xf32>
    %c64_20 = arith.constant 64 : index
    %c0_21 = arith.constant 0 : index
    %29 = vector.load %arg7[%c64_20, %c0_21] : memref<128x1xf32, #tpu.memory_space<vmem>>, vector<32x1xf32>
    %30 = vector.broadcast %29 : vector<32x1xf32> to vector<32x256xf32>
    %31 = arith.addf %28, %30 : vector<32x256xf32>
    %cst_22 = arith.constant 0.000000e+00 : f32
    %32 = vector.broadcast %cst_22 : f32 to vector<32x256xf32>
    %33 = arith.maximumf %31, %32 : vector<32x256xf32>
    %c96 = arith.constant 96 : index
    %c0_23 = arith.constant 0 : index
    %34 = vector.load %arg4[%c96, %c0_23] : memref<128x128xf32, #tpu.memory_space<vmem>>, vector<16x32xf32>
    %35 = arith.truncf %34 : vector<16x32xf32> to vector<16x32xbf16>
    %36 = arith.truncf %33 : vector<32x256xf32> to vector<32x256xbf16>
    %cst_24 = arith.constant dense<0.000000e+00> : vector<16x256xf32>
    %37 = tpu.matmul %35, %36, %cst_24 {dimension_numbers = #tpu.dot_dimension_numbers<[1], [0], [0], [1], [0, 0, 1, 1], [], []>} : vector<16x32xbf16>, vector<32x256xbf16>, vector<16x256xf32> -> vector<16x256xf32>
    %c96_25 = arith.constant 96 : index
    %c0_26 = arith.constant 0 : index
    %38 = vector.load %arg7[%c96_25, %c0_26] : memref<128x1xf32, #tpu.memory_space<vmem>>, vector<16x1xf32>
    %39 = vector.broadcast %38 : vector<16x1xf32> to vector<16x256xf32>
    %40 = arith.addf %37, %39 : vector<16x256xf32>
    %cst_27 = arith.constant 0.000000e+00 : f32
    %41 = vector.broadcast %cst_27 : f32 to vector<16x256xf32>
    %42 = arith.maximumf %40, %41 : vector<16x256xf32>
    %c112 = arith.constant 112 : index
    %c0_28 = arith.constant 0 : index
    %43 = vector.load %arg4[%c112, %c0_28] : memref<128x128xf32, #tpu.memory_space<vmem>>, vector<8x16xf32>
    %44 = arith.truncf %43 : vector<8x16xf32> to vector<8x16xbf16>
    %45 = arith.truncf %42 : vector<16x256xf32> to vector<16x256xbf16>
    %cst_29 = arith.constant dense<0.000000e+00> : vector<8x256xf32>
    %46 = tpu.matmul %44, %45, %cst_29 {dimension_numbers = #tpu.dot_dimension_numbers<[1], [0], [0], [1], [0, 0, 1, 1], [], []>} : vector<8x16xbf16>, vector<16x256xbf16>, vector<8x256xf32> -> vector<8x256xf32>
    %c112_30 = arith.constant 112 : index
    %c0_31 = arith.constant 0 : index
    %47 = vector.load %arg7[%c112_30, %c0_31] : memref<128x1xf32, #tpu.memory_space<vmem>>, vector<8x1xf32>
    %48 = vector.broadcast %47 : vector<8x1xf32> to vector<8x256xf32>
    %49 = arith.addf %46, %48 : vector<8x256xf32>
    %cst_32 = arith.constant 0.000000e+00 : f32
    %50 = vector.broadcast %cst_32 : f32 to vector<8x256xf32>
    %51 = arith.maximumf %49, %50 : vector<8x256xf32>
    %c120 = arith.constant 120 : index
    %c0_33 = arith.constant 0 : index
    %52 = vector.load %arg4[%c120, %c0_33] : memref<128x128xf32, #tpu.memory_space<vmem>>, vector<8x8xf32>
    %53 = arith.truncf %52 : vector<8x8xf32> to vector<8x8xbf16>
    %54 = arith.truncf %51 : vector<8x256xf32> to vector<8x256xbf16>
    %cst_34 = arith.constant dense<0.000000e+00> : vector<8x256xf32>
    %55 = tpu.matmul %53, %54, %cst_34 {dimension_numbers = #tpu.dot_dimension_numbers<[1], [0], [0], [1], [0, 0, 1, 1], [], []>} : vector<8x8xbf16>, vector<8x256xbf16>, vector<8x256xf32> -> vector<8x256xf32>
    %c120_35 = arith.constant 120 : index
    %c0_36 = arith.constant 0 : index
    %56 = vector.load %arg7[%c120_35, %c0_36] : memref<128x1xf32, #tpu.memory_space<vmem>>, vector<8x1xf32>
    %57 = vector.broadcast %56 : vector<8x1xf32> to vector<8x256xf32>
    %58 = arith.addf %55, %57 : vector<8x256xf32>
    %c0_37 = arith.constant 0 : index
    %c0_38 = arith.constant 0 : index
    %59 = vector.load %arg8[%c0_37, %c0_38] : memref<8x256xf32, #tpu.memory_space<vmem>>, vector<8x256xf32>
    tpu.vector_store %arg8[%c0_37, %c0_38], %58 {strides = array<i32>} : memref<8x256xf32, #tpu.memory_space<vmem>>, vector<8x256xf32>,
    return
  }
  func.func @transform_0(%arg0: i32) -> (i32, i32) {
    %c0_i32 = arith.constant 0 : i32
    %c0_i32_0 = arith.constant 0 : i32
    return %c0_i32, %arg0 : i32, i32
  }
  func.func @transform_1(%arg0: i32) -> (i32, i32) {
    %c0_i32 = arith.constant 0 : i32
    %c0_i32_0 = arith.constant 0 : i32
    %c0_i32_1 = arith.constant 0 : i32
    return %c0_i32, %c0_i32_0 : i32, i32
  }
  func.func @transform_2(%arg0: i32) -> (i32, i32) {
    %c0_i32 = arith.constant 0 : i32
    %c0_i32_0 = arith.constant 0 : i32
    %c0_i32_1 = arith.constant 0 : i32
    return %c0_i32, %c0_i32_0 : i32, i32
  }
  func.func @transform_3(%arg0: i32) -> (i32, i32) {
    %c0_i32 = arith.constant 0 : i32
    %c0_i32_0 = arith.constant 0 : i32
    %c0_i32_1 = arith.constant 0 : i32
    return %c0_i32, %c0_i32_0 : i32, i32
  }
  func.func @transform_4(%arg0: i32) -> (i32, i32) {
    %c0_i32 = arith.constant 0 : i32
    %c0_i32_0 = arith.constant 0 : i32
    %c0_i32_1 = arith.constant 0 : i32
    return %c0_i32, %c0_i32_0 : i32, i32
  }
  func.func @transform_5(%arg0: i32) -> (i32, i32) {
    %c0_i32 = arith.constant 0 : i32
    %c0_i32_0 = arith.constant 0 : i32
    %c0_i32_1 = arith.constant 0 : i32
    return %c0_i32, %c0_i32_0 : i32, i32
  }
  func.func @transform_6(%arg0: i32) -> (i32, i32) {
    %c0_i32 = arith.constant 0 : i32
    %c0_i32_0 = arith.constant 0 : i32
    %c0_i32_1 = arith.constant 0 : i32
    return %c0_i32, %c0_i32_0 : i32, i32
  }
  func.func @transform_7(%arg0: i32) -> (i32, i32) {
    %c0_i32 = arith.constant 0 : i32
    %c0_i32_0 = arith.constant 0 : i32
    return %c0_i32, %arg0 : i32, i32
  }
}

</mosaic_0001>

<llo_original>
// kernel: tpu_custom_call.1
$region0: #{tpu_custom_call.1}
  #allocation0 [shape = 'u32[]', space=smem, size = 0x4, offset = 0x4, fixed_abs, tag = 'smem constant byte address 0x4 - core index']
  #allocation1 [shape = 'u32[144,128]{1,0:T(1,128)}', space=vmem, size = 0x12000, scoped, tag = 'internal scratch']
  %s0 = inlined_call_operand.vmem [shape: bf16[128,256], index: 0, kind: input, shape index: {}]
  %s1 = inlined_call_operand.vmem [shape: bf16[256,128], index: 1, kind: input, shape index: {}]
  %s2 = inlined_call_operand.vmem [shape: bf16[128,256], index: 2, kind: input, shape index: {}]
  %s3 = inlined_call_operand.vmem [shape: f32[128,128], index: 3, kind: input, shape index: {}]
  %s4 = inlined_call_operand.vmem [shape: f32[256,1], index: 4, kind: input, shape index: {}]
  %s5 = inlined_call_operand.vmem [shape: f32[128,1], index: 5, kind: input, shape index: {}]
  %s6 = inlined_call_operand.vmem [shape: f32[128,1], index: 6, kind: input, shape index: {}]
  %s7 = inlined_call_operand.hbm [shape: f32[8,256], index: 7, kind: output, shape index: {}]
  %s8 = sld [smem:[#allocation0]]
  $region38: #{tpu_custom_call.1} parent=0
    _
  %s10 = ssub.s32 1, %s8
  %s11 = scalar_select 0, %s10, %s8
  $region1: #{tpu_custom_call.1} parent=0
    #allocation2 [shape = 'u8[8192]{0}', space=vmem, size = 0x2000, scoped, tag = 'output window, operand 0, single buffered']
    #allocation3 [shape = 's32[1]{0}', space=sflag, size = 0x4, scoped, tag = 'scoped memory for tpu_custom_call.1']
    %12 = vsyncpa [#allocation3], 0
    // Predicated region
    $region2: #{tpu_custom_call.1} parent=1 // pred_check
      _
    $region3: #{tpu_custom_call.1} parent=1 // pred_check_branch
      %14 = sbr.rel (0) target = $region5
    $region4: #{tpu_custom_call.1} parent=1 // pred_region
      _
    $region5: #{tpu_custom_call.1} parent=1 // pred_fallthru
      _
    // Predicated region
    $region6: #{tpu_custom_call.1} parent=1 // pred_check
      _
    $region7: #{tpu_custom_call.1} parent=1 // pred_check_branch
      %16 = sbr.rel (0) target = $region9
    $region8: #{tpu_custom_call.1} parent=1 // pred_region
      _
    $region9: #{tpu_custom_call.1} parent=1 // pred_fallthru
      _
    // Predicated region
    $region10: #{tpu_custom_call.1} parent=1 // pred_check
      _
    $region11: #{tpu_custom_call.1} parent=1 // pred_check_branch
      %18 = sbr.rel (0) target = $region13
    $region12: #{tpu_custom_call.1} parent=1 // pred_region
      _
    $region13: #{tpu_custom_call.1} parent=1 // pred_fallthru
      _
    // Predicated region
    $region14: #{tpu_custom_call.1} parent=1 // pred_check
      _
    $region15: #{tpu_custom_call.1} parent=1 // pred_check_branch
      %20 = sbr.rel (0) target = $region17
    $region16: #{tpu_custom_call.1} parent=1 // pred_region
      _
    $region17: #{tpu_custom_call.1} parent=1 // pred_fallthru
      _
    // Predicated region
    $region18: #{tpu_custom_call.1} parent=1 // pred_check
      _
    $region19: #{tpu_custom_call.1} parent=1 // pred_check_branch
      %22 = sbr.rel (0) target = $region21
    $region20: #{tpu_custom_call.1} parent=1 // pred_region
      _
    $region21: #{tpu_custom_call.1} parent=1 // pred_fallthru
      _
    // Predicated region
    $region22: #{tpu_custom_call.1} parent=1 // pred_check
      _
    $region23: #{tpu_custom_call.1} parent=1 // pred_check_branch
      %24 = sbr.rel (0) target = $region25
    $region24: #{tpu_custom_call.1} parent=1 // pred_region
      _
    $region25: #{tpu_custom_call.1} parent=1 // pred_fallthru
      _
    // Predicated region
    $region26: #{tpu_custom_call.1} parent=1 // pred_check
      _
    $region27: #{tpu_custom_call.1} parent=1 // pred_check_branch
      %26 = sbr.rel (0) target = $region29
    $region28: #{tpu_custom_call.1} parent=1 // pred_region
      _
    $region29: #{tpu_custom_call.1} parent=1 // pred_fallthru
      _
    %v28 = vld [vmem:[%s1] sm:$0xf]
    %v29 = vld [vmem:[%s1 + $0x4] sm:$0xf]
    %v30 = vld [vmem:[%s1 + $0x8] sm:$0xf]
    %v31 = vld [vmem:[%s1 + $0xc] sm:$0xf]
    %v32 = vld [vmem:[%s1 + $0x10] sm:$0xf]
    %v33 = vld [vmem:[%s1 + $0x14] sm:$0xf]
    %v34 = vld [vmem:[%s1 + $0x18] sm:$0xf]
    %v35 = vld [vmem:[%s1 + $0x1c] sm:$0xf]
    %v36 = vld [vmem:[%s1 + $0x20] sm:$0xf]
    %v37 = vld [vmem:[%s1 + $0x24] sm:$0xf]
    %v38 = vld [vmem:[%s1 + $0x28] sm:$0xf]
    %v39 = vld [vmem:[%s1 + $0x2c] sm:$0xf]
    %v40 = vld [vmem:[%s1 + $0x30] sm:$0xf]
    %v41 = vld [vmem:[%s1 + $0x34] sm:$0xf]
    %v42 = vld [vmem:[%s1 + $0x38] sm:$0xf]
    %v43 = vld [vmem:[%s1 + $0x3c] sm:$0xf]
    %v44 = vld [vmem:[%s1 + $0x40] sm:$0xf]
    %v45 = vld [vmem:[%s1 + $0x44] sm:$0xf]
    %v46 = vld [vmem:[%s1 + $0x48] sm:$0xf]
    %v47 = vld [vmem:[%s1 + $0x4c] sm:$0xf]
    %v48 = vld [vmem:[%s1 + $0x50] sm:$0xf]
    %v49 = vld [vmem:[%s1 + $0x54] sm:$0xf]
    %v50 = vld [vmem:[%s1 + $0x58] sm:$0xf]
    %v51 = vld [vmem:[%s1 + $0x5c] sm:$0xf]
    %v52 = vld [vmem:[%s1 + $0x60] sm:$0xf]
    %v53 = vld [vmem:[%s1 + $0x64] sm:$0xf]
    %v54 = vld [vmem:[%s1 + $0x68] sm:$0xf]
    %v55 = vld [vmem:[%s1 + $0x6c] sm:$0xf]
    %v56 = vld [vmem:[%s1 + $0x70] sm:$0xf]
    %v57 = vld [vmem:[%s1 + $0x74] sm:$0xf]
    %v58 = vld [vmem:[%s1 + $0x78] sm:$0xf]
    %v59 = vld [vmem:[%s1 + $0x7c] sm:$0xf]
    %v60 = vld [vmem:[%s0] sm:$0xff]
    %v61 = vld [vmem:[%s0 + $0x8] sm:$0xff]
    %v62 = vld [vmem:[%s0 + $0x10] sm:$0xff]
    %v63 = vld [vmem:[%s0 + $0x18] sm:$0xff]
    %v64 = vld [vmem:[%s0 + $0x20] sm:$0xff]
    %v65 = vld [vmem:[%s0 + $0x28] sm:$0xff]
    %v66 = vld [vmem:[%s0 + $0x30] sm:$0xff]
    %v67 = vld [vmem:[%s0 + $0x38] sm:$0xff]
    %v68 = vld [vmem:[%s0 + $0x40] sm:$0xff]
    %v69 = vld [vmem:[%s0 + $0x48] sm:$0xff]
    %v70 = vld [vmem:[%s0 + $0x50] sm:$0xff]
    %v71 = vld [vmem:[%s0 + $0x58] sm:$0xff]
    %v72 = vld [vmem:[%s0 + $0x60] sm:$0xff]
    %v73 = vld [vmem:[%s0 + $0x68] sm:$0xff]
    %v74 = vld [vmem:[%s0 + $0x70] sm:$0xff]
    %v75 = vld [vmem:[%s0 + $0x78] sm:$0xff]
    %v76 = vld [vmem:[%s4] sm:$0xff]
    %v77 = vld [vmem:[%s4 + $0x8] sm:$0xff]
    %v78 = vld [vmem:[%s4 + $0x10] sm:$0xff]
    %v79 = vld [vmem:[%s4 + $0x18] sm:$0xff]
    %v80 = vld [vmem:[%s4 + $0x20] sm:$0xff]
    %v81 = vld [vmem:[%s4 + $0x28] sm:$0xff]
    %v82 = vld [vmem:[%s4 + $0x30] sm:$0xff]
    %v83 = vld [vmem:[%s4 + $0x38] sm:$0xff]
    %v84 = vld [vmem:[%s4 + $0x40] sm:$0xff]
    %v85 = vld [vmem:[%s4 + $0x48] sm:$0xff]
    %v86 = vld [vmem:[%s4 + $0x50] sm:$0xff]
    %v87 = vld [vmem:[%s4 + $0x58] sm:$0xff]
    %v88 = vld [vmem:[%s4 + $0x60] sm:$0xff]
    %v89 = vld [vmem:[%s4 + $0x68] sm:$0xff]
    %v90 = vld [vmem:[%s4 + $0x70] sm:$0xff]
    %v91 = vld [vmem:[%s4 + $0x78] sm:$0xff]
    %v92 = vld [vmem:[%s4 + $0x80] sm:$0xff]
    %v93 = vld [vmem:[%s4 + $0x88] sm:$0xff]
    %v94 = vld [vmem:[%s4 + $0x90] sm:$0xff]
    %v95 = vld [vmem:[%s4 + $0x98] sm:$0xff]
    %v96 = vld [vmem:[%s4 + $0xa0] sm:$0xff]
    %v97 = vld [vmem:[%s4 + $0xa8] sm:$0xff]
    %v98 = vld [vmem:[%s4 + $0xb0] sm:$0xff]
    %v99 = vld [vmem:[%s4 + $0xb8] sm:$0xff]
    %v100 = vld [vmem:[%s4 + $0xc0] sm:$0xff]
    %v101 = vld [vmem:[%s4 + $0xc8] sm:$0xff]
    %v102 = vld [vmem:[%s4 + $0xd0] sm:$0xff]
    %v103 = vld [vmem:[%s4 + $0xd8] sm:$0xff]
    %v104 = vld [vmem:[%s4 + $0xe0] sm:$0xff]
    %v105 = vld [vmem:[%s4 + $0xe8] sm:$0xff]
    %v106 = vld [vmem:[%s4 + $0xf0] sm:$0xff]
    %v107 = vld [vmem:[%s4 + $0xf8] sm:$0xff]
    %109 = vset.pattern.permute.xlu0 0
    %110 = vperm.xlu0 %109, %v76
    %v111 = vpop.permute.xlu0 %110
    %114 = vset.pattern.permute.xlu0 0
    %115 = vperm.xlu0 %114, %v77
    %v116 = vpop.permute.xlu0 %115
    %119 = vset.pattern.permute.xlu0 0
    %120 = vperm.xlu0 %119, %v78
    %v121 = vpop.permute.xlu0 %120
    %124 = vset.pattern.permute.xlu0 0
    %125 = vperm.xlu0 %124, %v79
    %v126 = vpop.permute.xlu0 %125
    %129 = vset.pattern.permute.xlu0 0
    %130 = vperm.xlu0 %129, %v80
    %v131 = vpop.permute.xlu0 %130
    %134 = vset.pattern.permute.xlu0 0
    %135 = vperm.xlu0 %134, %v81
    %v136 = vpop.permute.xlu0 %135
    %139 = vset.pattern.permute.xlu0 0
    %140 = vperm.xlu0 %139, %v82
    %v141 = vpop.permute.xlu0 %140
    %144 = vset.pattern.permute.xlu0 0
    %145 = vperm.xlu0 %144, %v83
    %v146 = vpop.permute.xlu0 %145
    %149 = vset.pattern.permute.xlu0 0
    %150 = vperm.xlu0 %149, %v84
    %v151 = vpop.permute.xlu0 %150
    %154 = vset.pattern.permute.xlu0 0
    %155 = vperm.xlu0 %154, %v85
    %v156 = vpop.permute.xlu0 %155
    %159 = vset.pattern.permute.xlu0 0
    %160 = vperm.xlu0 %159, %v86
    %v161 = vpop.permute.xlu0 %160
    %164 = vset.pattern.permute.xlu0 0
    %165 = vperm.xlu0 %164, %v87
    %v166 = vpop.permute.xlu0 %165
    %169 = vset.pattern.permute.xlu0 0
    %170 = vperm.xlu0 %169, %v88
    %v171 = vpop.permute.xlu0 %170
    %174 = vset.pattern.permute.xlu0 0
    %175 = vperm.xlu0 %174, %v89
    %v176 = vpop.permute.xlu0 %175
    %179 = vset.pattern.permute.xlu0 0
    %180 = vperm.xlu0 %179, %v90
    %v181 = vpop.permute.xlu0 %180
    %184 = vset.pattern.permute.xlu0 0
    %185 = vperm.xlu0 %184, %v91
    %v186 = vpop.permute.xlu0 %185
    %189 = vset.pattern.permute.xlu0 0
    %190 = vperm.xlu0 %189, %v92
    %v191 = vpop.permute.xlu0 %190
    %194 = vset.pattern.permute.xlu0 0
    %195 = vperm.xlu0 %194, %v93
    %v196 = vpop.permute.xlu0 %195
    %199 = vset.pattern.permute.xlu0 0
    %200 = vperm.xlu0 %199, %v94
    %v201 = vpop.permute.xlu0 %200
    %204 = vset.pattern.permute.xlu0 0
    %205 = vperm.xlu0 %204, %v95
    %v206 = vpop.permute.xlu0 %205
    %209 = vset.pattern.permute.xlu0 0
    %210 = vperm.xlu0 %209, %v96
    %v211 = vpop.permute.xlu0 %210
    %214 = vset.pattern.permute.xlu0 0
    %215 = vperm.xlu0 %214, %v97
    %v216 = vpop.permute.xlu0 %215
    %219 = vset.pattern.permute.xlu0 0
    %220 = vperm.xlu0 %219, %v98
    %v221 = vpop.permute.xlu0 %220
    %224 = vset.pattern.permute.xlu0 0
    %225 = vperm.xlu0 %224, %v99
    %v226 = vpop.permute.xlu0 %225
    %229 = vset.pattern.permute.xlu0 0
    %230 = vperm.xlu0 %229, %v100
    %v231 = vpop.permute.xlu0 %230
    %234 = vset.pattern.permute.xlu0 0
    %235 = vperm.xlu0 %234, %v101
    %v236 = vpop.permute.xlu0 %235
    %239 = vset.pattern.permute.xlu0 0
    %240 = vperm.xlu0 %239, %v102
    %v241 = vpop.permute.xlu0 %240
    %244 = vset.pattern.permute.xlu0 0
    %245 = vperm.xlu0 %244, %v103
    %v246 = vpop.permute.xlu0 %245
    %249 = vset.pattern.permute.xlu0 0
    %250 = vperm.xlu0 %249, %v104
    %v251 = vpop.permute.xlu0 %250
    %254 = vset.pattern.permute.xlu0 0
    %255 = vperm.xlu0 %254, %v105
    %v256 = vpop.permute.xlu0 %255
    %259 = vset.pattern.permute.xlu0 0
    %260 = vperm.xlu0 %259, %v106
    %v261 = vpop.permute.xlu0 %260
    %264 = vset.pattern.permute.xlu0 0
    %265 = vperm.xlu0 %264, %v107
    %v266 = vpop.permute.xlu0 %265
    %v300 = vunpack.c.l.b16 %v28
    %v301 = vunpack.c.l.b16 %v29
    %v302 = vunpack.c.l.b16 %v30
    %v303 = vunpack.c.l.b16 %v31
    %v304 = vunpack.c.l.b16 %v32
    %v305 = vunpack.c.l.b16 %v33
    %v306 = vunpack.c.l.b16 %v34
    %v307 = vunpack.c.l.b16 %v35
    %v308 = vunpack.c.l.b16 %v36
    %v309 = vunpack.c.l.b16 %v37
    %v310 = vunpack.c.l.b16 %v38
    %v311 = vunpack.c.l.b16 %v39
    %v312 = vunpack.c.l.b16 %v40
    %v313 = vunpack.c.l.b16 %v41
    %v314 = vunpack.c.l.b16 %v42
    %v315 = vunpack.c.l.b16 %v43
    %v316 = vunpack.c.l.b16 %v44
    %v317 = vunpack.c.l.b16 %v45
    %v318 = vunpack.c.l.b16 %v46
    %v319 = vunpack.c.l.b16 %v47
    %v320 = vunpack.c.l.b16 %v48
    %v321 = vunpack.c.l.b16 %v49
    %v322 = vunpack.c.l.b16 %v50
    %v323 = vunpack.c.l.b16 %v51
    %v324 = vunpack.c.l.b16 %v52
    %v325 = vunpack.c.l.b16 %v53
    %v326 = vunpack.c.l.b16 %v54
    %v327 = vunpack.c.l.b16 %v55
    %v328 = vunpack.c.l.b16 %v56
    %v329 = vunpack.c.l.b16 %v57
    %v330 = vunpack.c.l.b16 %v58
    %v331 = vunpack.c.l.b16 %v59
    %v332 = vpack.c.b16 %v301, %v300
    %v333 = vpack.c.b16 %v303, %v302
    %v334 = vpack.c.b16 %v305, %v304
    %v335 = vpack.c.b16 %v307, %v306
    %v336 = vpack.c.b16 %v309, %v308
    %v337 = vpack.c.b16 %v311, %v310
    %v338 = vpack.c.b16 %v313, %v312
    %v339 = vpack.c.b16 %v315, %v314
    %v340 = vpack.c.b16 %v317, %v316
    %v341 = vpack.c.b16 %v319, %v318
    %v342 = vpack.c.b16 %v321, %v320
    %v343 = vpack.c.b16 %v323, %v322
    %v344 = vpack.c.b16 %v325, %v324
    %v345 = vpack.c.b16 %v327, %v326
    %v346 = vpack.c.b16 %v329, %v328
    %v347 = vpack.c.b16 %v331, %v330
    %v380 = vunpack.c.l.b16 %v60
    %v381 = vunpack.c.h.b16 %v60
    %v382 = vunpack.c.l.b16 %v61
    %v383 = vunpack.c.h.b16 %v61
    %v384 = vunpack.c.l.b16 %v62
    %v385 = vunpack.c.h.b16 %v62
    %v386 = vunpack.c.l.b16 %v63
    %v387 = vunpack.c.h.b16 %v63
    %v388 = vunpack.c.l.b16 %v64
    %v389 = vunpack.c.h.b16 %v64
    %v390 = vunpack.c.l.b16 %v65
    %v391 = vunpack.c.h.b16 %v65
    %v392 = vunpack.c.l.b16 %v66
    %v393 = vunpack.c.h.b16 %v66
    %v394 = vunpack.c.l.b16 %v67
    %v395 = vunpack.c.h.b16 %v67
    %v396 = vunpack.c.l.b16 %v68
    %v397 = vunpack.c.h.b16 %v68
    %v398 = vunpack.c.l.b16 %v69
    %v399 = vunpack.c.h.b16 %v69
    %v400 = vunpack.c.l.b16 %v70
    %v401 = vunpack.c.h.b16 %v70
    %v402 = vunpack.c.l.b16 %v71
    %v403 = vunpack.c.h.b16 %v71
    %v404 = vunpack.c.l.b16 %v72
    %v405 = vunpack.c.h.b16 %v72
    %v406 = vunpack.c.l.b16 %v73
    %v407 = vunpack.c.h.b16 %v73
    %v408 = vunpack.c.l.b16 %v74
    %v409 = vunpack.c.h.b16 %v74
    %v410 = vunpack.c.l.b16 %v75
    %v411 = vunpack.c.h.b16 %v75
    %v412 = vpack.c.b16 %v382, %v380
    %v413 = vpack.c.b16 %v383, %v381
    %v414 = vpack.c.b16 %v386, %v384
    %v415 = vpack.c.b16 %v387, %v385
    %v416 = vpack.c.b16 %v390, %v388
    %v417 = vpack.c.b16 %v391, %v389
    %v418 = vpack.c.b16 %v394, %v392
    %v419 = vpack.c.b16 %v395, %v393
    %v420 = vpack.c.b16 %v398, %v396
    %v421 = vpack.c.b16 %v399, %v397
    %v422 = vpack.c.b16 %v402, %v400
    %v423 = vpack.c.b16 %v403, %v401
    %v424 = vpack.c.b16 %v406, %v404
    %v425 = vpack.c.b16 %v407, %v405
    %v426 = vpack.c.b16 %v410, %v408
    %v427 = vpack.c.b16 %v411, %v409
    %444 = vmatprep.subr.bf16.mxu0 %v413
    %445 = vmatpush1.bf16.msra.mxu0 %v412
    %446 = vmatprep.subr.bf16.mxu0 %v415
    %447 = vmatpush1.bf16.msra.mxu0 %v414
    %448 = vmatprep.subr.bf16.mxu0 %v417
    %449 = vmatpush1.bf16.msra.mxu0 %v416
    %450 = vmatprep.subr.bf16.mxu0 %v419
    %451 = vmatpush1.bf16.msra.mxu0 %v418
    %452 = vmatprep.subr.bf16.mxu0 %v421
    %453 = vmatpush1.bf16.msra.mxu0 %v420
    %454 = vmatprep.subr.bf16.mxu0 %v423
    %455 = vmatpush1.bf16.msra.mxu0 %v422
    %456 = vmatprep.subr.bf16.mxu0 %v425
    %457 = vmatpush1.bf16.msra.mxu0 %v424
    %458 = vmatprep.subr.bf16.mxu0 %v427
    %459 = vmatpush1.bf16.msra.mxu0 %v426
    %460 = vmatprep.subr.bf16.mxu0 0
    %461 = vmatpush1.bf16.msra.mxu0 0
    %462 = vmatprep.subr.bf16.mxu0 0
    %463 = vmatpush1.bf16.msra.mxu0 0
    %464 = vmatprep.subr.bf16.mxu0 0
    %465 = vmatpush1.bf16.msra.mxu0 0
    %466 = vmatprep.subr.bf16.mxu0 0
    %467 = vmatpush1.bf16.msra.mxu0 0
    %468 = vmatprep.subr.bf16.mxu0 0
    %469 = vmatpush1.bf16.msra.mxu0 0
    %470 = vmatprep.subr.bf16.mxu0 0
    %471 = vmatpush1.bf16.msra.mxu0 0
    %472 = vmatprep.subr.bf16.mxu0 0
    %473 = vmatpush1.bf16.msra.mxu0 0
    %474 = vmatprep.subr.bf16.mxu0 0
    %475 = vmatpush1.bf16.msra.mxu0 0
    %476 = vmatprep.mubr.bf16.mxu0 0
    %477 = vmatmul.mubr.bf16.gmra.mrb[0].mxu0 %v332
    %v478 = vpop.f32.mrb[0].mxu0
    %v479 = vadd.f32 %v111, %v478
    %v480 = vpop.f32.mrb[0].mxu0
    %v481 = vadd.f32 %v111, %v480
    %v482 = vpop.f32.mrb[0].mxu0
    %v483 = vadd.f32 %v116, %v482
    %v484 = vpop.f32.mrb[0].mxu0
    %v485 = vadd.f32 %v116, %v484
    %486 = vmatprep.mubr.bf16.mxu0 0
    %487 = vmatmul.mubr.bf16.gmra.mrb[0].mxu0 %v333
    %v488 = vpop.f32.mrb[0].mxu0
    %v489 = vadd.f32 %v121, %v488
    %v490 = vpop.f32.mrb[0].mxu0
    %v491 = vadd.f32 %v121, %v490
    %v492 = vpop.f32.mrb[0].mxu0
    %v493 = vadd.f32 %v126, %v492
    %v494 = vpop.f32.mrb[0].mxu0
    %v495 = vadd.f32 %v126, %v494
    %496 = vmatprep.mubr.bf16.mxu0 0
    %497 = vmatmul.mubr.bf16.gmra.mrb[0].mxu0 %v334
    %v498 = vpop.f32.mrb[0].mxu0
    %v499 = vadd.f32 %v131, %v498
    %v500 = vpop.f32.mrb[0].mxu0
    %v501 = vadd.f32 %v131, %v500
    %v502 = vpop.f32.mrb[0].mxu0
    %v503 = vadd.f32 %v136, %v502
    %v504 = vpop.f32.mrb[0].mxu0
    %v505 = vadd.f32 %v136, %v504
    %506 = vmatprep.mubr.bf16.mxu0 0
    %507 = vmatmul.mubr.bf16.gmra.mrb[0].mxu0 %v335
    %v508 = vpop.f32.mrb[0].mxu0
    %v509 = vadd.f32 %v141, %v508
    %v510 = vpop.f32.mrb[0].mxu0
    %v511 = vadd.f32 %v141, %v510
    %v512 = vpop.f32.mrb[0].mxu0
    %v513 = vadd.f32 %v146, %v512
    %v514 = vpop.f32.mrb[0].mxu0
    %v515 = vadd.f32 %v146, %v514
    %516 = vmatprep.mubr.bf16.mxu0 0
    %517 = vmatmul.mubr.bf16.gmra.mrb[0].mxu0 %v336
    %v518 = vpop.f32.mrb[0].mxu0
    %v519 = vadd.f32 %v151, %v518
    %v520 = vpop.f32.mrb[0].mxu0
    %v521 = vadd.f32 %v151, %v520
    %v522 = vpop.f32.mrb[0].mxu0
    %v523 = vadd.f32 %v156, %v522
    %v524 = vpop.f32.mrb[0].mxu0
    %v525 = vadd.f32 %v156, %v524
    %526 = vmatprep.mubr.bf16.mxu0 0
    %527 = vmatmul.mubr.bf16.gmra.mrb[0].mxu0 %v337
    %v528 = vpop.f32.mrb[0].mxu0
    %v529 = vadd.f32 %v161, %v528
    %v530 = vpop.f32.mrb[0].mxu0
    %v531 = vadd.f32 %v161, %v530
    %v532 = vpop.f32.mrb[0].mxu0
    %v533 = vadd.f32 %v166, %v532
    %v534 = vpop.f32.mrb[0].mxu0
    %v535 = vadd.f32 %v166, %v534
    %536 = vmatprep.mubr.bf16.mxu0 0
    %537 = vmatmul.mubr.bf16.gmra.mrb[0].mxu0 %v338
    %v538 = vpop.f32.mrb[0].mxu0
    %v539 = vadd.f32 %v171, %v538
    %v540 = vpop.f32.mrb[0].mxu0
    %v541 = vadd.f32 %v171, %v540
    %v542 = vpop.f32.mrb[0].mxu0
    %v543 = vadd.f32 %v176, %v542
    %v544 = vpop.f32.mrb[0].mxu0
    %v545 = vadd.f32 %v176, %v544
    %546 = vmatprep.mubr.bf16.mxu0 0
    %547 = vmatmul.mubr.bf16.gmra.mrb[0].mxu0 %v339
    %v548 = vpop.f32.mrb[0].mxu0
    %v549 = vadd.f32 %v181, %v548
    %v550 = vpop.f32.mrb[0].mxu0
    %v551 = vadd.f32 %v181, %v550
    %v552 = vpop.f32.mrb[0].mxu0
    %v553 = vadd.f32 %v186, %v552
    %v554 = vpop.f32.mrb[0].mxu0
    %v555 = vadd.f32 %v186, %v554
    %556 = vmatprep.mubr.bf16.mxu0 0
    %557 = vmatmul.mubr.bf16.gmra.mrb[0].mxu0 %v340
    %v558 = vpop.f32.mrb[0].mxu0
    %v559 = vadd.f32 %v191, %v558
    %v560 = vpop.f32.mrb[0].mxu0
    %v561 = vadd.f32 %v191, %v560
    %v562 = vpop.f32.mrb[0].mxu0
    %v563 = vadd.f32 %v196, %v562
    %v564 = vpop.f32.mrb[0].mxu0
    %v565 = vadd.f32 %v196, %v564
    %566 = vmatprep.mubr.bf16.mxu0 0
    %567 = vmatmul.mubr.bf16.gmra.mrb[0].mxu0 %v341
    %v568 = vpop.f32.mrb[0].mxu0
    %v569 = vadd.f32 %v201, %v568
    %v570 = vpop.f32.mrb[0].mxu0
    %v571 = vadd.f32 %v201, %v570
    %v572 = vpop.f32.mrb[0].mxu0
    %v573 = vadd.f32 %v206, %v572
    %v574 = vpop.f32.mrb[0].mxu0
    %v575 = vadd.f32 %v206, %v574
    %576 = vmatprep.mubr.bf16.mxu0 0
    %577 = vmatmul.mubr.bf16.gmra.mrb[0].mxu0 %v342
    %v578 = vpop.f32.mrb[0].mxu0
    %v579 = vadd.f32 %v211, %v578
    %v580 = vpop.f32.mrb[0].mxu0
    %v581 = vadd.f32 %v211, %v580
    %v582 = vpop.f32.mrb[0].mxu0
    %v583 = vadd.f32 %v216, %v582
    %v584 = vpop.f32.mrb[0].mxu0
    %v585 = vadd.f32 %v216, %v584
    %586 = vmatprep.mubr.bf16.mxu0 0
    %587 = vmatmul.mubr.bf16.gmra.mrb[0].mxu0 %v343
    %v588 = vpop.f32.mrb[0].mxu0
    %v589 = vadd.f32 %v221, %v588
    %v590 = vpop.f32.mrb[0].mxu0
    %v591 = vadd.f32 %v221, %v590
    %v592 = vpop.f32.mrb[0].mxu0
    %v593 = vadd.f32 %v226, %v592
    %v594 = vpop.f32.mrb[0].mxu0
    %v595 = vadd.f32 %v226, %v594
    %596 = vmatprep.mubr.bf16.mxu0 0
    %597 = vmatmul.mubr.bf16.gmra.mrb[0].mxu0 %v344
    %v598 = vpop.f32.mrb[0].mxu0
    %v599 = vadd.f32 %v231, %v598
    %v600 = vpop.f32.mrb[0].mxu0
    %v601 = vadd.f32 %v231, %v600
    %v602 = vpop.f32.mrb[0].mxu0
    %v603 = vadd.f32 %v236, %v602
    %v604 = vpop.f32.mrb[0].mxu0
    %v605 = vadd.f32 %v236, %v604
    %606 = vmatprep.mubr.bf16.mxu0 0
    %607 = vmatmul.mubr.bf16.gmra.mrb[0].mxu0 %v345
    %v608 = vpop.f32.mrb[0].mxu0
    %v609 = vadd.f32 %v241, %v608
    %v610 = vpop.f32.mrb[0].mxu0
    %v611 = vadd.f32 %v241, %v610
    %v612 = vpop.f32.mrb[0].mxu0
    %v613 = vadd.f32 %v246, %v612
    %v614 = vpop.f32.mrb[0].mxu0
    %v615 = vadd.f32 %v246, %v614
    %616 = vmatprep.mubr.bf16.mxu0 0
    %617 = vmatmul.mubr.bf16.gmra.mrb[0].mxu0 %v346
    %v618 = vpop.f32.mrb[0].mxu0
    %v619 = vadd.f32 %v251, %v618
    %v620 = vpop.f32.mrb[0].mxu0
    %v621 = vadd.f32 %v251, %v620
    %v622 = vpop.f32.mrb[0].mxu0
    %v623 = vadd.f32 %v256, %v622
    %v624 = vpop.f32.mrb[0].mxu0
    %v625 = vadd.f32 %v256, %v624
    %626 = vmatprep.mubr.bf16.mxu0 0
    %627 = vmatmul.mubr.bf16.gmra.mrb[0].mxu0 %v347
    %v628 = vpop.f32.mrb[0].mxu0
    %v629 = vadd.f32 %v261, %v628
    %v630 = vpop.f32.mrb[0].mxu0
    %v631 = vadd.f32 %v261, %v630
    %v632 = vpop.f32.mrb[0].mxu0
    %v633 = vadd.f32 %v266, %v632
    %v634 = vpop.f32.mrb[0].mxu0
    %v635 = vadd.f32 %v266, %v634
    %636 = vdwg.mxu0
    %v637 = vmax.f32 %v479, 0.0
    %v638 = vmax.f32 %v481, 0.0
    %v639 = vmax.f32 %v483, 0.0
    %v640 = vmax.f32 %v485, 0.0
    %v641 = vmax.f32 %v489, 0.0
    %v642 = vmax.f32 %v491, 0.0
    %v643 = vmax.f32 %v493, 0.0
    %v644 = vmax.f32 %v495, 0.0
    %v645 = vmax.f32 %v499, 0.0
    %v646 = vmax.f32 %v501, 0.0
    %v647 = vmax.f32 %v503, 0.0
    %v648 = vmax.f32 %v505, 0.0
    %v649 = vmax.f32 %v509, 0.0
    %v650 = vmax.f32 %v511, 0.0
    %v651 = vmax.f32 %v513, 0.0
    %v652 = vmax.f32 %v515, 0.0
    %v653 = vmax.f32 %v519, 0.0
    %v654 = vmax.f32 %v521, 0.0
    %v655 = vmax.f32 %v523, 0.0
    %v656 = vmax.f32 %v525, 0.0
    %v657 = vmax.f32 %v529, 0.0
    %v658 = vmax.f32 %v531, 0.0
    %v659 = vmax.f32 %v533, 0.0
    %v660 = vmax.f32 %v535, 0.0
    %v661 = vmax.f32 %v539, 0.0
    %v662 = vmax.f32 %v541, 0.0
    %v663 = vmax.f32 %v543, 0.0
    %v664 = vmax.f32 %v545, 0.0
    %v665 = vmax.f32 %v549, 0.0
    %v666 = vmax.f32 %v551, 0.0
    %v667 = vmax.f32 %v553, 0.0
    %v668 = vmax.f32 %v555, 0.0
    %v669 = vmax.f32 %v559, 0.0
    %v670 = vmax.f32 %v561, 0.0
    %v671 = vmax.f32 %v563, 0.0
    %v672 = vmax.f32 %v565, 0.0
    %v673 = vmax.f32 %v569, 0.0
    %v674 = vmax.f32 %v571, 0.0
    %v675 = vmax.f32 %v573, 0.0
    %v676 = vmax.f32 %v575, 0.0
    %v677 = vmax.f32 %v579, 0.0
    %v678 = vmax.f32 %v581, 0.0
    %v679 = vmax.f32 %v583, 0.0
    %v680 = vmax.f32 %v585, 0.0
    %v681 = vmax.f32 %v589, 0.0
    %v682 = vmax.f32 %v591, 0.0
    %v683 = vmax.f32 %v593, 0.0
    %v684 = vmax.f32 %v595, 0.0
    %v685 = vmax.f32 %v599, 0.0
    %v686 = vmax.f32 %v601, 0.0
    %v687 = vmax.f32 %v603, 0.0
    %v688 = vmax.f32 %v605, 0.0
    %v689 = vmax.f32 %v609, 0.0
    %v690 = vmax.f32 %v611, 0.0
    %v691 = vmax.f32 %v613, 0.0
    %v692 = vmax.f32 %v615, 0.0
    %v693 = vmax.f32 %v619, 0.0
    %v694 = vmax.f32 %v621, 0.0
    %v695 = vmax.f32 %v623, 0.0
    %v696 = vmax.f32 %v625, 0.0
    %v697 = vmax.f32 %v629, 0.0
    %v698 = vmax.f32 %v631, 0.0
    %v699 = vmax.f32 %v633, 0.0
    %v700 = vmax.f32 %v635, 0.0
    %v701 = vld [vmem:[%s2] sm:$0xff]
    %v702 = vld [vmem:[%s2 + $0x8] sm:$0xff]
    %v703 = vld [vmem:[%s2 + $0x10] sm:$0xff]
    %v704 = vld [vmem:[%s2 + $0x18] sm:$0xff]
    %v705 = vld [vmem:[%s2 + $0x20] sm:$0xff]
    %v706 = vld [vmem:[%s2 + $0x28] sm:$0xff]
    %v707 = vld [vmem:[%s2 + $0x30] sm:$0xff]
    %v708 = vld [vmem:[%s2 + $0x38] sm:$0xff]
    %v709 = vld [vmem:[%s2 + $0x40] sm:$0xff]
    %v710 = vld [vmem:[%s2 + $0x48] sm:$0xff]
    %v711 = vld [vmem:[%s2 + $0x50] sm:$0xff]
    %v712 = vld [vmem:[%s2 + $0x58] sm:$0xff]
    %v713 = vld [vmem:[%s2 + $0x60] sm:$0xff]
    %v714 = vld [vmem:[%s2 + $0x68] sm:$0xff]
    %v715 = vld [vmem:[%s2 + $0x70] sm:$0xff]
    %v716 = vld [vmem:[%s2 + $0x78] sm:$0xff]
    %v717 = vpack.c.bf16 %v639, %v637
    %v718 = vpack.c.bf16 %v640, %v638
    %v719 = vpack.c.bf16 %v643, %v641
    %v720 = vpack.c.bf16 %v644, %v642
    %v721 = vpack.c.bf16 %v647, %v645
    %v722 = vpack.c.bf16 %v648, %v646
    %v723 = vpack.c.bf16 %v651, %v649
    %v724 = vpack.c.bf16 %v652, %v650
    %v725 = vpack.c.bf16 %v655, %v653
    %v726 = vpack.c.bf16 %v656, %v654
    %v727 = vpack.c.bf16 %v659, %v657
    %v728 = vpack.c.bf16 %v660, %v658
    %v729 = vpack.c.bf16 %v663, %v661
    %v730 = vpack.c.bf16 %v664, %v662
    %v731 = vpack.c.bf16 %v667, %v665
    %v732 = vpack.c.bf16 %v668, %v666
    %v733 = vpack.c.bf16 %v671, %v669
    %v734 = vpack.c.bf16 %v672, %v670
    %v735 = vpack.c.bf16 %v675, %v673
    %v736 = vpack.c.bf16 %v676, %v674
    %v737 = vpack.c.bf16 %v679, %v677
    %v738 = vpack.c.bf16 %v680, %v678
    %v739 = vpack.c.bf16 %v683, %v681
    %v740 = vpack.c.bf16 %v684, %v682
    %v741 = vpack.c.bf16 %v687, %v685
    %v742 = vpack.c.bf16 %v688, %v686
    %v743 = vpack.c.bf16 %v691, %v689
    %v744 = vpack.c.bf16 %v692, %v690
    %v745 = vpack.c.bf16 %v695, %v693
    %v746 = vpack.c.bf16 %v696, %v694
    %v747 = vpack.c.bf16 %v699, %v697
    %v748 = vpack.c.bf16 %v700, %v698
    %v749 = vld [vmem:[%s5] sm:$0xff]
    %v750 = vld [vmem:[%s5 + $0x8] sm:$0xff]
    %v751 = vld [vmem:[%s5 + $0x10] sm:$0xff]
    %v752 = vld [vmem:[%s5 + $0x18] sm:$0xff]
    %v753 = vld [vmem:[%s5 + $0x20] sm:$0xff]
    %v754 = vld [vmem:[%s5 + $0x28] sm:$0xff]
    %v755 = vld [vmem:[%s5 + $0x30] sm:$0xff]
    %v756 = vld [vmem:[%s5 + $0x38] sm:$0xff]
    %v757 = vld [vmem:[%s5 + $0x40] sm:$0xff]
    %v758 = vld [vmem:[%s5 + $0x48] sm:$0xff]
    %v759 = vld [vmem:[%s5 + $0x50] sm:$0xff]
    %v760 = vld [vmem:[%s5 + $0x58] sm:$0xff]
    %v761 = vld [vmem:[%s5 + $0x60] sm:$0xff]
    %v762 = vld [vmem:[%s5 + $0x68] sm:$0xff]
    %v763 = vld [vmem:[%s5 + $0x70] sm:$0xff]
    %v764 = vld [vmem:[%s5 + $0x78] sm:$0xff]
    %766 = vset.pattern.permute.xlu0 0
    %767 = vperm.xlu0 %766, %v749
    %v768 = vpop.permute.xlu0 %767
    %771 = vset.pattern.permute.xlu0 0
    %772 = vperm.xlu0 %771, %v750
    %v773 = vpop.permute.xlu0 %772
    %776 = vset.pattern.permute.xlu0 0
    %777 = vperm.xlu0 %776, %v751
    %v778 = vpop.permute.xlu0 %777
    %781 = vset.pattern.permute.xlu0 0
    %782 = vperm.xlu0 %781, %v752
    %v783 = vpop.permute.xlu0 %782
    %786 = vset.pattern.permute.xlu0 0
    %787 = vperm.xlu0 %786, %v753
    %v788 = vpop.permute.xlu0 %787
    %791 = vset.pattern.permute.xlu0 0
    %792 = vperm.xlu0 %791, %v754
    %v793 = vpop.permute.xlu0 %792
    %796 = vset.pattern.permute.xlu0 0
    %797 = vperm.xlu0 %796, %v755
    %v798 = vpop.permute.xlu0 %797
    %801 = vset.pattern.permute.xlu0 0
    %802 = vperm.xlu0 %801, %v756
    %v803 = vpop.permute.xlu0 %802
    %806 = vset.pattern.permute.xlu0 0
    %807 = vperm.xlu0 %806, %v757
    %v808 = vpop.permute.xlu0 %807
    %811 = vset.pattern.permute.xlu0 0
    %812 = vperm.xlu0 %811, %v758
    %v813 = vpop.permute.xlu0 %812
    %816 = vset.pattern.permute.xlu0 0
    %817 = vperm.xlu0 %816, %v759
    %v818 = vpop.permute.xlu0 %817
    %821 = vset.pattern.permute.xlu0 0
    %822 = vperm.xlu0 %821, %v760
    %v823 = vpop.permute.xlu0 %822
    %826 = vset.pattern.permute.xlu0 0
    %827 = vperm.xlu0 %826, %v761
    %v828 = vpop.permute.xlu0 %827
    %831 = vset.pattern.permute.xlu0 0
    %832 = vperm.xlu0 %831, %v762
    %v833 = vpop.permute.xlu0 %832
    %836 = vset.pattern.permute.xlu0 0
    %837 = vperm.xlu0 %836, %v763
    %v838 = vpop.permute.xlu0 %837
    %841 = vset.pattern.permute.xlu0 0
    %842 = vperm.xlu0 %841, %v764
    %v843 = vpop.permute.xlu0 %842
    %v861 = vunpack.c.l.b16 %v701
    %v862 = vunpack.c.h.b16 %v701
    %v863 = vunpack.c.l.b16 %v702
    %v864 = vunpack.c.h.b16 %v702
    %v865 = vunpack.c.l.b16 %v703
    %v866 = vunpack.c.h.b16 %v703
    %v867 = vunpack.c.l.b16 %v704
    %v868 = vunpack.c.h.b16 %v704
    %v869 = vunpack.c.l.b16 %v705
    %v870 = vunpack.c.h.b16 %v705
    %v871 = vunpack.c.l.b16 %v706
    %v872 = vunpack.c.h.b16 %v706
    %v873 = vunpack.c.l.b16 %v707
    %v874 = vunpack.c.h.b16 %v707
    %v875 = vunpack.c.l.b16 %v708
    %v876 = vunpack.c.h.b16 %v708
    %v877 = vunpack.c.l.b16 %v709
    %v878 = vunpack.c.h.b16 %v709
    %v879 = vunpack.c.l.b16 %v710
    %v880 = vunpack.c.h.b16 %v710
    %v881 = vunpack.c.l.b16 %v711
    %v882 = vunpack.c.h.b16 %v711
    %v883 = vunpack.c.l.b16 %v712
    %v884 = vunpack.c.h.b16 %v712
    %v885 = vunpack.c.l.b16 %v713
    %v886 = vunpack.c.h.b16 %v713
    %v887 = vunpack.c.l.b16 %v714
    %v888 = vunpack.c.h.b16 %v714
    %v889 = vunpack.c.l.b16 %v715
    %v890 = vunpack.c.h.b16 %v715
    %v891 = vunpack.c.l.b16 %v716
    %v892 = vunpack.c.h.b16 %v716
    %v893 = vpack.c.b16 %v863, %v861
    %v894 = vpack.c.b16 %v864, %v862
    %v895 = vpack.c.b16 %v867, %v865
    %v896 = vpack.c.b16 %v868, %v866
    %v897 = vpack.c.b16 %v871, %v869
    %v898 = vpack.c.b16 %v872, %v870
    %v899 = vpack.c.b16 %v875, %v873
    %v900 = vpack.c.b16 %v876, %v874
    %v901 = vpack.c.b16 %v879, %v877
    %v902 = vpack.c.b16 %v880, %v878
    %v903 = vpack.c.b16 %v883, %v881
    %v904 = vpack.c.b16 %v884, %v882
    %v905 = vpack.c.b16 %v887, %v885
    %v906 = vpack.c.b16 %v888, %v886
    %v907 = vpack.c.b16 %v891, %v889
    %v908 = vpack.c.b16 %v892, %v890
    %925 = vmatprep.subr.bf16.mxu0 %v718
    %926 = vmatpush1.bf16.msra.mxu0 %v717
    %927 = vmatprep.subr.bf16.mxu0 %v720
    %928 = vmatpush1.bf16.msra.mxu0 %v719
    %929 = vmatprep.subr.bf16.mxu0 %v722
    %930 = vmatpush1.bf16.msra.mxu0 %v721
    %931 = vmatprep.subr.bf16.mxu0 %v724
    %932 = vmatpush1.bf16.msra.mxu0 %v723
    %933 = vmatprep.subr.bf16.mxu0 %v726
    %934 = vmatpush1.bf16.msra.mxu0 %v725
    %935 = vmatprep.subr.bf16.mxu0 %v728
    %936 = vmatpush1.bf16.msra.mxu0 %v727
    %937 = vmatprep.subr.bf16.mxu0 %v730
    %938 = vmatpush1.bf16.msra.mxu0 %v729
    %939 = vmatprep.subr.bf16.mxu0 %v732
    %940 = vmatpush1.bf16.msra.mxu0 %v731
    %941 = vmatprep.subr.bf16.mxu0 %v734
    %942 = vmatpush1.bf16.msra.mxu0 %v733
    %943 = vmatprep.subr.bf16.mxu0 %v736
    %944 = vmatpush1.bf16.msra.mxu0 %v735
    %945 = vmatprep.subr.bf16.mxu0 %v738
    %946 = vmatpush1.bf16.msra.mxu0 %v737
    %947 = vmatprep.subr.bf16.mxu0 %v740
    %948 = vmatpush1.bf16.msra.mxu0 %v739
    %949 = vmatprep.subr.bf16.mxu0 %v742
    %950 = vmatpush1.bf16.msra.mxu0 %v741
    %951 = vmatprep.subr.bf16.mxu0 %v744
    %952 = vmatpush1.bf16.msra.mxu0 %v743
    %953 = vmatprep.subr.bf16.mxu0 %v746
    %954 = vmatpush1.bf16.msra.mxu0 %v745
    %955 = vmatprep.subr.bf16.mxu0 %v748
    %956 = vmatpush1.bf16.msra.mxu0 %v747
    %957 = vmatprep.mubr.bf16.mxu0 %v894
    %958 = vmatmul.mubr.bf16.gmra.mrb[0].mxu0 %v893
    %v959 = vpop.f32.mrb[0].mxu0
    %v960 = vadd.f32 %v768, %v959
    %v961 = vpop.f32.mrb[0].mxu0
    %v962 = vadd.f32 %v768, %v961
    %v963 = vpop.f32.mrb[0].mxu0
    %v964 = vadd.f32 %v773, %v963
    %v965 = vpop.f32.mrb[0].mxu0
    %v966 = vadd.f32 %v773, %v965
    %967 = vmatprep.mubr.bf16.mxu0 %v896
    %968 = vmatmul.mubr.bf16.gmra.mrb[0].mxu0 %v895
    %v969 = vpop.f32.mrb[0].mxu0
    %v970 = vadd.f32 %v778, %v969
    %v971 = vpop.f32.mrb[0].mxu0
    %v972 = vadd.f32 %v778, %v971
    %v973 = vpop.f32.mrb[0].mxu0
    %v974 = vadd.f32 %v783, %v973
    %v975 = vpop.f32.mrb[0].mxu0
    %v976 = vadd.f32 %v783, %v975
    %977 = vmatprep.mubr.bf16.mxu0 %v898
    %978 = vmatmul.mubr.bf16.gmra.mrb[0].mxu0 %v897
    %v979 = vpop.f32.mrb[0].mxu0
    %v980 = vadd.f32 %v788, %v979
    %v981 = vpop.f32.mrb[0].mxu0
    %v982 = vadd.f32 %v788, %v981
    %v983 = vpop.f32.mrb[0].mxu0
    %v984 = vadd.f32 %v793, %v983
    %v985 = vpop.f32.mrb[0].mxu0
    %v986 = vadd.f32 %v793, %v985
    %987 = vmatprep.mubr.bf16.mxu0 %v900
    %988 = vmatmul.mubr.bf16.gmra.mrb[0].mxu0 %v899
    %v989 = vpop.f32.mrb[0].mxu0
    %v990 = vadd.f32 %v798, %v989
    %v991 = vpop.f32.mrb[0].mxu0
    %v992 = vadd.f32 %v798, %v991
    %v993 = vpop.f32.mrb[0].mxu0
    %v994 = vadd.f32 %v803, %v993
    %v995 = vpop.f32.mrb[0].mxu0
    %v996 = vadd.f32 %v803, %v995
    %997 = vmatprep.mubr.bf16.mxu0 %v902
    %998 = vmatmul.mubr.bf16.gmra.mrb[0].mxu0 %v901
    %v999 = vpop.f32.mrb[0].mxu0
    %v1000 = vadd.f32 %v808, %v999
    %v1001 = vpop.f32.mrb[0].mxu0
    %v1002 = vadd.f32 %v808, %v1001
    %v1003 = vpop.f32.mrb[0].mxu0
    %v1004 = vadd.f32 %v813, %v1003
    %v1005 = vpop.f32.mrb[0].mxu0
    %v1006 = vadd.f32 %v813, %v1005
    %1007 = vmatprep.mubr.bf16.mxu0 %v904
    %1008 = vmatmul.mubr.bf16.gmra.mrb[0].mxu0 %v903
    %v1009 = vpop.f32.mrb[0].mxu0
    %v1010 = vadd.f32 %v818, %v1009
    %v1011 = vpop.f32.mrb[0].mxu0
    %v1012 = vadd.f32 %v818, %v1011
    %v1013 = vpop.f32.mrb[0].mxu0
    %v1014 = vadd.f32 %v823, %v1013
    %v1015 = vpop.f32.mrb[0].mxu0
    %v1016 = vadd.f32 %v823, %v1015
    %1017 = vmatprep.mubr.bf16.mxu0 %v906
    %1018 = vmatmul.mubr.bf16.gmra.mrb[0].mxu0 %v905
    %v1019 = vpop.f32.mrb[0].mxu0
    %v1020 = vadd.f32 %v828, %v1019
    %v1021 = vpop.f32.mrb[0].mxu0
    %v1022 = vadd.f32 %v828, %v1021
    %v1023 = vpop.f32.mrb[0].mxu0
    %v1024 = vadd.f32 %v833, %v1023
    %v1025 = vpop.f32.mrb[0].mxu0
    %v1026 = vadd.f32 %v833, %v1025
    %1027 = vmatprep.mubr.bf16.mxu0 %v908
    %1028 = vmatmul.mubr.bf16.gmra.mrb[0].mxu0 %v907
    %v1029 = vpop.f32.mrb[0].mxu0
    %v1030 = vadd.f32 %v838, %v1029
    %v1031 = vpop.f32.mrb[0].mxu0
    %v1032 = vadd.f32 %v838, %v1031
    %v1033 = vpop.f32.mrb[0].mxu0
    %v1034 = vadd.f32 %v843, %v1033
    %v1035 = vpop.f32.mrb[0].mxu0
    %v1036 = vadd.f32 %v843, %v1035
    %1037 = vdwg.mxu0
    %v1038 = vmax.f32 %v960, 0.0
    %v1039 = vmax.f32 %v962, 0.0
    %v1040 = vmax.f32 %v964, 0.0
    %v1041 = vmax.f32 %v966, 0.0
    %v1042 = vmax.f32 %v970, 0.0
    %v1043 = vmax.f32 %v972, 0.0
    %v1044 = vmax.f32 %v974, 0.0
    %v1045 = vmax.f32 %v976, 0.0
    %v1046 = vmax.f32 %v980, 0.0
    %v1047 = vmax.f32 %v982, 0.0
    %v1048 = vmax.f32 %v984, 0.0
    %v1049 = vmax.f32 %v986, 0.0
    %v1050 = vmax.f32 %v990, 0.0
    %v1051 = vmax.f32 %v992, 0.0
    %v1052 = vmax.f32 %v994, 0.0
    %v1053 = vmax.f32 %v996, 0.0
    %v1054 = vmax.f32 %v1000, 0.0
    %v1055 = vmax.f32 %v1002, 0.0
    %v1056 = vmax.f32 %v1004, 0.0
    %v1057 = vmax.f32 %v1006, 0.0
    %v1058 = vmax.f32 %v1010, 0.0
    %v1059 = vmax.f32 %v1012, 0.0
    %v1060 = vmax.f32 %v1014, 0.0
    %v1061 = vmax.f32 %v1016, 0.0
    %v1062 = vmax.f32 %v1020, 0.0
    %v1063 = vmax.f32 %v1022, 0.0
    %v1064 = vmax.f32 %v1024, 0.0
    %v1065 = vmax.f32 %v1026, 0.0
    %v1066 = vmax.f32 %v1030, 0.0
    %v1067 = vmax.f32 %v1032, 0.0
    %v1068 = vmax.f32 %v1034, 0.0
    %v1069 = vmax.f32 %v1036, 0.0
    %v1070 = vld [vmem:[%s3] sm:$0xff]
    %v1071 = vld [vmem:[%s3 + $0x8] sm:$0xff]
    %v1072 = vld [vmem:[%s3 + $0x10] sm:$0xff]
    %v1073 = vld [vmem:[%s3 + $0x18] sm:$0xff]
    %v1074 = vld [vmem:[%s3 + $0x20] sm:$0xff]
    %v1075 = vld [vmem:[%s3 + $0x28] sm:$0xff]
    %v1076 = vld [vmem:[%s3 + $0x30] sm:$0xff]
    %v1077 = vld [vmem:[%s3 + $0x38] sm:$0xff]
    %v1078 = vpack.c.bf16 %v1071, %v1070
    %v1079 = vpack.c.bf16 %v1073, %v1072
    %v1080 = vpack.c.bf16 %v1075, %v1074
    %v1081 = vpack.c.bf16 %v1077, %v1076
    %v1082 = vpack.c.bf16 %v1040, %v1038
    %v1083 = vpack.c.bf16 %v1041, %v1039
    %v1084 = vpack.c.bf16 %v1044, %v1042
    %v1085 = vpack.c.bf16 %v1045, %v1043
    %v1086 = vpack.c.bf16 %v1048, %v1046
    %v1087 = vpack.c.bf16 %v1049, %v1047
    %v1088 = vpack.c.bf16 %v1052, %v1050
    %v1089 = vpack.c.bf16 %v1053, %v1051
    %v1090 = vpack.c.bf16 %v1056, %v1054
    %v1091 = vpack.c.bf16 %v1057, %v1055
    %v1092 = vpack.c.bf16 %v1060, %v1058
    %v1093 = vpack.c.bf16 %v1061, %v1059
    %v1094 = vpack.c.bf16 %v1064, %v1062
    %v1095 = vpack.c.bf16 %v1065, %v1063
    %v1096 = vpack.c.bf16 %v1068, %v1066
    %v1097 = vpack.c.bf16 %v1069, %v1067
    %v1098 = vld [vmem:[%s6] sm:$0xff]
    %v1099 = vld [vmem:[%s6 + $0x8] sm:$0xff]
    %v1100 = vld [vmem:[%s6 + $0x10] sm:$0xff]
    %v1101 = vld [vmem:[%s6 + $0x18] sm:$0xff]
    %v1102 = vld [vmem:[%s6 + $0x20] sm:$0xff]
    %v1103 = vld [vmem:[%s6 + $0x28] sm:$0xff]
    %v1104 = vld [vmem:[%s6 + $0x30] sm:$0xff]
    %v1105 = vld [vmem:[%s6 + $0x38] sm:$0xff]
    %1107 = vset.pattern.permute.xlu0 0
    %1108 = vperm.xlu0 %1107, %v1098
    %v1109 = vpop.permute.xlu0 %1108
    %1112 = vset.pattern.permute.xlu0 0
    %1113 = vperm.xlu0 %1112, %v1099
    %v1114 = vpop.permute.xlu0 %1113
    %1117 = vset.pattern.permute.xlu0 0
    %1118 = vperm.xlu0 %1117, %v1100
    %v1119 = vpop.permute.xlu0 %1118
    %1122 = vset.pattern.permute.xlu0 0
    %1123 = vperm.xlu0 %1122, %v1101
    %v1124 = vpop.permute.xlu0 %1123
    %1127 = vset.pattern.permute.xlu0 0
    %1128 = vperm.xlu0 %1127, %v1102
    %v1129 = vpop.permute.xlu0 %1128
    %1132 = vset.pattern.permute.xlu0 0
    %1133 = vperm.xlu0 %1132, %v1103
    %v1134 = vpop.permute.xlu0 %1133
    %1137 = vset.pattern.permute.xlu0 0
    %1138 = vperm.xlu0 %1137, %v1104
    %v1139 = vpop.permute.xlu0 %1138
    %1142 = vset.pattern.permute.xlu0 0
    %1143 = vperm.xlu0 %1142, %v1105
    %v1144 = vpop.permute.xlu0 %1143
    %1146 = vmatprep.subr.bf16.mxu0 %v1083
    %1147 = vmatpush1.bf16.msra.mxu0 %v1082
    %1148 = vmatprep.subr.bf16.mxu0 %v1085
    %1149 = vmatpush1.bf16.msra.mxu0 %v1084
    %1150 = vmatprep.subr.bf16.mxu0 %v1087
    %1151 = vmatpush1.bf16.msra.mxu0 %v1086
    %1152 = vmatprep.subr.bf16.mxu0 %v1089
    %1153 = vmatpush1.bf16.msra.mxu0 %v1088
    %1154 = vmatprep.subr.bf16.mxu0 %v1091
    %1155 = vmatpush1.bf16.msra.mxu0 %v1090
    %1156 = vmatprep.subr.bf16.mxu0 %v1093
    %1157 = vmatpush1.bf16.msra.mxu0 %v1092
    %1158 = vmatprep.subr.bf16.mxu0 %v1095
    %1159 = vmatpush1.bf16.msra.mxu0 %v1094
    %1160 = vmatprep.subr.bf16.mxu0 %v1097
    %1161 = vmatpush1.bf16.msra.mxu0 %v1096
    %1162 = vmatprep.subr.bf16.mxu0 0
    %1163 = vmatpush1.bf16.msra.mxu0 0
    %1164 = vmatprep.subr.bf16.mxu0 0
    %1165 = vmatpush1.bf16.msra.mxu0 0
    %1166 = vmatprep.subr.bf16.mxu0 0
    %1167 = vmatpush1.bf16.msra.mxu0 0
    %1168 = vmatprep.subr.bf16.mxu0 0
    %1169 = vmatpush1.bf16.msra.mxu0 0
    %1170 = vmatprep.subr.bf16.mxu0 0
    %1171 = vmatpush1.bf16.msra.mxu0 0
    %1172 = vmatprep.subr.bf16.mxu0 0
    %1173 = vmatpush1.bf16.msra.mxu0 0
    %1174 = vmatprep.subr.bf16.mxu0 0
    %1175 = vmatpush1.bf16.msra.mxu0 0
    %1176 = vmatprep.subr.bf16.mxu0 0
    %1177 = vmatpush1.bf16.msra.mxu0 0
    %1178 = vmatprep.mubr.bf16.mxu0 0
    %1179 = vmatmul.mubr.bf16.gmra.mrb[0].mxu0 %v1078
    %v1180 = vpop.f32.mrb[0].mxu0
    %v1181 = vadd.f32 %v1109, %v1180
    %v1182 = vpop.f32.mrb[0].mxu0
    %v1183 = vadd.f32 %v1109, %v1182
    %v1184 = vpop.f32.mrb[0].mxu0
    %v1185 = vadd.f32 %v1114, %v1184
    %v1186 = vpop.f32.mrb[0].mxu0
    %v1187 = vadd.f32 %v1114, %v1186
    %1188 = vmatprep.mubr.bf16.mxu0 0
    %1189 = vmatmul.mubr.bf16.gmra.mrb[0].mxu0 %v1079
    %v1190 = vpop.f32.mrb[0].mxu0
    %v1191 = vadd.f32 %v1119, %v1190
    %v1192 = vpop.f32.mrb[0].mxu0
    %v1193 = vadd.f32 %v1119, %v1192
    %v1194 = vpop.f32.mrb[0].mxu0
    %v1195 = vadd.f32 %v1124, %v1194
    %v1196 = vpop.f32.mrb[0].mxu0
    %v1197 = vadd.f32 %v1124, %v1196
    %1198 = vmatprep.mubr.bf16.mxu0 0
    %1199 = vmatmul.mubr.bf16.gmra.mrb[0].mxu0 %v1080
    %v1200 = vpop.f32.mrb[0].mxu0
    %v1201 = vadd.f32 %v1129, %v1200
    %v1202 = vpop.f32.mrb[0].mxu0
    %v1203 = vadd.f32 %v1129, %v1202
    %v1204 = vpop.f32.mrb[0].mxu0
    %v1205 = vadd.f32 %v1134, %v1204
    %v1206 = vpop.f32.mrb[0].mxu0
    %v1207 = vadd.f32 %v1134, %v1206
    %1208 = vmatprep.mubr.bf16.mxu0 0
    %1209 = vmatmul.mubr.bf16.gmra.mrb[0].mxu0 %v1081
    %v1210 = vpop.f32.mrb[0].mxu0
    %v1211 = vadd.f32 %v1139, %v1210
    %v1212 = vpop.f32.mrb[0].mxu0
    %v1213 = vadd.f32 %v1139, %v1212
    %v1214 = vpop.f32.mrb[0].mxu0
    %v1215 = vadd.f32 %v1144, %v1214
    %v1216 = vpop.f32.mrb[0].mxu0
    %v1217 = vadd.f32 %v1144, %v1216
    %1218 = vdwg.mxu0
    %v1219 = vmax.f32 %v1181, 0.0
    %v1220 = vmax.f32 %v1183, 0.0
    %v1221 = vmax.f32 %v1185, 0.0
    %v1222 = vmax.f32 %v1187, 0.0
    %v1223 = vmax.f32 %v1191, 0.0
    %v1224 = vmax.f32 %v1193, 0.0
    %v1225 = vmax.f32 %v1195, 0.0
    %v1226 = vmax.f32 %v1197, 0.0
    %v1227 = vmax.f32 %v1201, 0.0
    %v1228 = vmax.f32 %v1203, 0.0
    %v1229 = vmax.f32 %v1205, 0.0
    %v1230 = vmax.f32 %v1207, 0.0
    %v1231 = vmax.f32 %v1211, 0.0
    %v1232 = vmax.f32 %v1213, 0.0
    %v1233 = vmax.f32 %v1215, 0.0
    %v1234 = vmax.f32 %v1217, 0.0
    %v1235 = vld [vmem:[%s3 + $0x40] sm:$0xff]
    %v1236 = vld [vmem:[%s3 + $0x48] sm:$0xff]
    %v1237 = vld [vmem:[%s3 + $0x50] sm:$0xff]
    %v1238 = vld [vmem:[%s3 + $0x58] sm:$0xff]
    %v1239 = vpack.c.bf16 %v1236, %v1235
    %v1240 = vpack.c.bf16 %v1238, %v1237
    %v1241 = vpack.c.bf16 %v1221, %v1219
    %v1242 = vpack.c.bf16 %v1222, %v1220
    %v1243 = vpack.c.bf16 %v1225, %v1223
    %v1244 = vpack.c.bf16 %v1226, %v1224
    %v1245 = vpack.c.bf16 %v1229, %v1227
    %v1246 = vpack.c.bf16 %v1230, %v1228
    %v1247 = vpack.c.bf16 %v1233, %v1231
    %v1248 = vpack.c.bf16 %v1234, %v1232
    %v1249 = vld [vmem:[%s6 + $0x40] sm:$0xff]
    %v1250 = vld [vmem:[%s6 + $0x48] sm:$0xff]
    %v1251 = vld [vmem:[%s6 + $0x50] sm:$0xff]
    %v1252 = vld [vmem:[%s6 + $0x58] sm:$0xff]
    %1254 = vset.pattern.permute.xlu0 0
    %1255 = vperm.xlu0 %1254, %v1249
    %v1256 = vpop.permute.xlu0 %1255
    %1259 = vset.pattern.permute.xlu0 0
    %1260 = vperm.xlu0 %1259, %v1250
    %v1261 = vpop.permute.xlu0 %1260
    %1264 = vset.pattern.permute.xlu0 0
    %1265 = vperm.xlu0 %1264, %v1251
    %v1266 = vpop.permute.xlu0 %1265
    %1269 = vset.pattern.permute.xlu0 0
    %1270 = vperm.xlu0 %1269, %v1252
    %v1271 = vpop.permute.xlu0 %1270
    %vm1273 = vcmask 523264
    %v1275 = vsel %vm1273, %v1239, 0
    %v1278 = vsel %vm1273, %v1240, 0
    %1280 = vmatprep.subr.bf16.mxu0 %v1242
    %1281 = vmatpush1.bf16.msra.mxu0 %v1241
    %1282 = vmatprep.subr.bf16.mxu0 %v1244
    %1283 = vmatpush1.bf16.msra.mxu0 %v1243
    %1284 = vmatprep.subr.bf16.mxu0 %v1246
    %1285 = vmatpush1.bf16.msra.mxu0 %v1245
    %1286 = vmatprep.subr.bf16.mxu0 %v1248
    %1287 = vmatpush1.bf16.msra.mxu0 %v1247
    %1288 = vmatprep.subr.bf16.mxu0 0
    %1289 = vmatpush1.bf16.msra.mxu0 0
    %1290 = vmatprep.subr.bf16.mxu0 0
    %1291 = vmatpush1.bf16.msra.mxu0 0
    %1292 = vmatprep.subr.bf16.mxu0 0
    %1293 = vmatpush1.bf16.msra.mxu0 0
    %1294 = vmatprep.subr.bf16.mxu0 0
    %1295 = vmatpush1.bf16.msra.mxu0 0
    %1296 = vmatprep.subr.bf16.mxu0 0
    %1297 = vmatpush1.bf16.msra.mxu0 0
    %1298 = vmatprep.subr.bf16.mxu0 0
    %1299 = vmatpush1.bf16.msra.mxu0 0
    %1300 = vmatprep.subr.bf16.mxu0 0
    %1301 = vmatpush1.bf16.msra.mxu0 0
    %1302 = vmatprep.subr.bf16.mxu0 0
    %1303 = vmatpush1.bf16.msra.mxu0 0
    %1304 = vmatprep.subr.bf16.mxu0 0
    %1305 = vmatpush1.bf16.msra.mxu0 0
    %1306 = vmatprep.subr.bf16.mxu0 0
    %1307 = vmatpush1.bf16.msra.mxu0 0
    %1308 = vmatprep.subr.bf16.mxu0 0
    %1309 = vmatpush1.bf16.msra.mxu0 0
    %1310 = vmatprep.subr.bf16.mxu0 0
    %1311 = vmatpush1.bf16.msra.mxu0 0
    %1312 = vmatprep.mubr.bf16.mxu0 0
    %1313 = vmatmul.mubr.bf16.gmra.mrb[0].mxu0 %v1275
    %v1314 = vpop.f32.mrb[0].mxu0
    %v1315 = vadd.f32 %v1256, %v1314
    %v1316 = vpop.f32.mrb[0].mxu0
    %v1317 = vadd.f32 %v1256, %v1316
    %v1318 = vpop.f32.mrb[0].mxu0
    %v1319 = vadd.f32 %v1261, %v1318
    %v1320 = vpop.f32.mrb[0].mxu0
    %v1321 = vadd.f32 %v1261, %v1320
    %1322 = vmatprep.mubr.bf16.mxu0 0
    %1323 = vmatmul.mubr.bf16.gmra.mrb[0].mxu0 %v1278
    %v1324 = vpop.f32.mrb[0].mxu0
    %v1325 = vadd.f32 %v1266, %v1324
    %v1326 = vpop.f32.mrb[0].mxu0
    %v1327 = vadd.f32 %v1266, %v1326
    %v1328 = vpop.f32.mrb[0].mxu0
    %v1329 = vadd.f32 %v1271, %v1328
    %v1330 = vpop.f32.mrb[0].mxu0
    %v1331 = vadd.f32 %v1271, %v1330
    %1332 = vdwg.mxu0
    %v1333 = vmax.f32 %v1315, 0.0
    %v1334 = vmax.f32 %v1317, 0.0
    %v1335 = vmax.f32 %v1319, 0.0
    %v1336 = vmax.f32 %v1321, 0.0
    %v1337 = vmax.f32 %v1325, 0.0
    %v1338 = vmax.f32 %v1327, 0.0
    %v1339 = vmax.f32 %v1329, 0.0
    %v1340 = vmax.f32 %v1331, 0.0
    %v1341 = vld [vmem:[%s3 + $0x60] sm:$0xff]
    %v1342 = vld [vmem:[%s3 + $0x68] sm:$0xff]
    %v1343 = vpack.c.bf16 %v1342, %v1341
    %v1344 = vpack.c.bf16 %v1335, %v1333
    %v1345 = vpack.c.bf16 %v1336, %v1334
    %v1346 = vpack.c.bf16 %v1339, %v1337
    %v1347 = vpack.c.bf16 %v1340, %v1338
    %v1348 = vld [vmem:[%s6 + $0x60] sm:$0xff]
    %v1349 = vld [vmem:[%s6 + $0x68] sm:$0xff]
    %1351 = vset.pattern.permute.xlu0 0
    %1352 = vperm.xlu0 %1351, %v1348
    %v1353 = vpop.permute.xlu0 %1352
    %1356 = vset.pattern.permute.xlu0 0
    %1357 = vperm.xlu0 %1356, %v1349
    %v1358 = vpop.permute.xlu0 %1357
    %vm1360 = vcmask 261120
    %v1362 = vsel %vm1360, %v1343, 0
    %1364 = vmatprep.subr.bf16.mxu0 %v1345
    %1365 = vmatpush1.bf16.msra.mxu0 %v1344
    %1366 = vmatprep.subr.bf16.mxu0 %v1347
    %1367 = vmatpush1.bf16.msra.mxu0 %v1346
    %1368 = vmatprep.subr.bf16.mxu0 0
    %1369 = vmatpush1.bf16.msra.mxu0 0
    %1370 = vmatprep.subr.bf16.mxu0 0
    %1371 = vmatpush1.bf16.msra.mxu0 0
    %1372 = vmatprep.subr.bf16.mxu0 0
    %1373 = vmatpush1.bf16.msra.mxu0 0
    %1374 = vmatprep.subr.bf16.mxu0 0
    %1375 = vmatpush1.bf16.msra.mxu0 0
    %1376 = vmatprep.subr.bf16.mxu0 0
    %1377 = vmatpush1.bf16.msra.mxu0 0
    %1378 = vmatprep.subr.bf16.mxu0 0
    %1379 = vmatpush1.bf16.msra.mxu0 0
    %1380 = vmatprep.subr.bf16.mxu0 0
    %1381 = vmatpush1.bf16.msra.mxu0 0
    %1382 = vmatprep.subr.bf16.mxu0 0
    %1383 = vmatpush1.bf16.msra.mxu0 0
    %1384 = vmatprep.subr.bf16.mxu0 0
    %1385 = vmatpush1.bf16.msra.mxu0 0
    %1386 = vmatprep.subr.bf16.mxu0 0
    %1387 = vmatpush1.bf16.msra.mxu0 0
    %1388 = vmatprep.subr.bf16.mxu0 0
    %1389 = vmatpush1.bf16.msra.mxu0 0
    %1390 = vmatprep.subr.bf16.mxu0 0
    %1391 = vmatpush1.bf16.msra.mxu0 0
    %1392 = vmatprep.subr.bf16.mxu0 0
    %1393 = vmatpush1.bf16.msra.mxu0 0
    %1394 = vmatprep.subr.bf16.mxu0 0
    %1395 = vmatpush1.bf16.msra.mxu0 0
    %1396 = vmatprep.mubr.bf16.mxu0 0
    %1397 = vmatmul.mubr.bf16.gmra.mrb[0].mxu0 %v1362
    %v1398 = vpop.f32.mrb[0].mxu0
    %v1399 = vadd.f32 %v1353, %v1398
    %v1400 = vpop.f32.mrb[0].mxu0
    %v1401 = vadd.f32 %v1353, %v1400
    %v1402 = vpop.f32.mrb[0].mxu0
    %v1403 = vadd.f32 %v1358, %v1402
    %v1404 = vpop.f32.mrb[0].mxu0
    %v1405 = vadd.f32 %v1358, %v1404
    %1406 = vdwg.mxu0
    %v1407 = vmax.f32 %v1399, 0.0
    %v1408 = vmax.f32 %v1401, 0.0
    %v1409 = vmax.f32 %v1403, 0.0
    %v1410 = vmax.f32 %v1405, 0.0
    %v1411 = vld [vmem:[%s3 + $0x70] sm:$0xff]
    %v1412 = vpack.c.bf16 %v1411, %v1411
    %v1413 = vpack.c.bf16 %v1409, %v1407
    %v1414 = vpack.c.bf16 %v1410, %v1408
    %v1415 = vld [vmem:[%s6 + $0x70] sm:$0xff]
    %1417 = vset.pattern.permute.xlu0 0
    %1418 = vperm.xlu0 %1417, %v1415
    %v1419 = vpop.permute.xlu0 %1418
    %vm1421 = vcmask 130048
    %v1423 = vsel %vm1421, %v1412, 0
    %1425 = vmatprep.subr.bf16.mxu0 %v1414
    %1426 = vmatpush1.bf16.msra.mxu0 %v1413
    %1427 = vmatprep.subr.bf16.mxu0 0
    %1428 = vmatpush1.bf16.msra.mxu0 0
    %1429 = vmatprep.subr.bf16.mxu0 0
    %1430 = vmatpush1.bf16.msra.mxu0 0
    %1431 = vmatprep.subr.bf16.mxu0 0
    %1432 = vmatpush1.bf16.msra.mxu0 0
    %1433 = vmatprep.subr.bf16.mxu0 0
    %1434 = vmatpush1.bf16.msra.mxu0 0
    %1435 = vmatprep.subr.bf16.mxu0 0
    %1436 = vmatpush1.bf16.msra.mxu0 0
    %1437 = vmatprep.subr.bf16.mxu0 0
    %1438 = vmatpush1.bf16.msra.mxu0 0
    %1439 = vmatprep.subr.bf16.mxu0 0
    %1440 = vmatpush1.bf16.msra.mxu0 0
    %1441 = vmatprep.subr.bf16.mxu0 0
    %1442 = vmatpush1.bf16.msra.mxu0 0
    %1443 = vmatprep.subr.bf16.mxu0 0
    %1444 = vmatpush1.bf16.msra.mxu0 0
    %1445 = vmatprep.subr.bf16.mxu0 0
    %1446 = vmatpush1.bf16.msra.mxu0 0
    %1447 = vmatprep.subr.bf16.mxu0 0
    %1448 = vmatpush1.bf16.msra.mxu0 0
    %1449 = vmatprep.subr.bf16.mxu0 0
    %1450 = vmatpush1.bf16.msra.mxu0 0
    %1451 = vmatprep.subr.bf16.mxu0 0
    %1452 = vmatpush1.bf16.msra.mxu0 0
    %1453 = vmatprep.subr.bf16.mxu0 0
    %1454 = vmatpush1.bf16.msra.mxu0 0
    %1455 = vmatprep.subr.bf16.mxu0 0
    %1456 = vmatpush1.bf16.msra.mxu0 0
    %1457 = vmatprep.mubr.bf16.mxu0 0
    %1458 = vmatmul.mubr.bf16.gmra.mrb[0].mxu0 %v1423
    %v1459 = vpop.f32.mrb[0].mxu0
    %v1460 = vadd.f32 %v1419, %v1459
    %v1461 = vpop.f32.mrb[0].mxu0
    %v1462 = vadd.f32 %v1419, %v1461
    %v1463 = vpop.f32.mrb[0].mxu0
    %v1464 = vpop.f32.mrb[0].mxu0
    %1465 = vdwg.mxu0
    %v1466 = vmax.f32 %v1460, 0.0
    %v1467 = vmax.f32 %v1462, 0.0
    %v1468 = vld [vmem:[%s3 + $0x78] sm:$0xff]
    %v1469 = vpack.c.bf16 %v1468, %v1468
    %v1470 = vpack.c.bf16 %v1466, %v1466
    %v1471 = vpack.c.bf16 %v1467, %v1467
    %v1472 = vld [vmem:[%s6 + $0x78] sm:$0xff]
    %1474 = vset.pattern.permute.xlu0 0
    %1475 = vperm.xlu0 %1474, %v1472
    %v1476 = vpop.permute.xlu0 %1475
    %vm1478 = vcmask 64512
    %v1480 = vsel %vm1478, %v1469, 0
    %vm1482 = vcmask 1043456
    %v1484 = vsel %vm1482, %v1470, 0
    %v1487 = vsel %vm1482, %v1471, 0
    %1489 = vmatprep.subr.bf16.mxu0 %v1487
    %1490 = vmatpush1.bf16.msra.mxu0 %v1484
    %1491 = vmatprep.subr.bf16.mxu0 0
    %1492 = vmatpush1.bf16.msra.mxu0 0
    %1493 = vmatprep.subr.bf16.mxu0 0
    %1494 = vmatpush1.bf16.msra.mxu0 0
    %1495 = vmatprep.subr.bf16.mxu0 0
    %1496 = vmatpush1.bf16.msra.mxu0 0
    %1497 = vmatprep.subr.bf16.mxu0 0
    %1498 = vmatpush1.bf16.msra.mxu0 0
    %1499 = vmatprep.subr.bf16.mxu0 0
    %1500 = vmatpush1.bf16.msra.mxu0 0
    %1501 = vmatprep.subr.bf16.mxu0 0
    %1502 = vmatpush1.bf16.msra.mxu0 0
    %1503 = vmatprep.subr.bf16.mxu0 0
    %1504 = vmatpush1.bf16.msra.mxu0 0
    %1505 = vmatprep.subr.bf16.mxu0 0
    %1506 = vmatpush1.bf16.msra.mxu0 0
    %1507 = vmatprep.subr.bf16.mxu0 0
    %1508 = vmatpush1.bf16.msra.mxu0 0
    %1509 = vmatprep.subr.bf16.mxu0 0
    %1510 = vmatpush1.bf16.msra.mxu0 0
    %1511 = vmatprep.subr.bf16.mxu0 0
    %1512 = vmatpush1.bf16.msra.mxu0 0
    %1513 = vmatprep.subr.bf16.mxu0 0
    %1514 = vmatpush1.bf16.msra.mxu0 0
    %1515 = vmatprep.subr.bf16.mxu0 0
    %1516 = vmatpush1.bf16.msra.mxu0 0
    %1517 = vmatprep.subr.bf16.mxu0 0
    %1518 = vmatpush1.bf16.msra.mxu0 0
    %1519 = vmatprep.subr.bf16.mxu0 0
    %1520 = vmatpush1.bf16.msra.mxu0 0
    %1521 = vmatprep.mubr.bf16.mxu0 0
    %1522 = vmatmul.mubr.bf16.gmra.mrb[0].mxu0 %v1480
    %v1523 = vpop.f32.mrb[0].mxu0
    %v1524 = vadd.f32 %v1476, %v1523
    %v1525 = vpop.f32.mrb[0].mxu0
    %v1526 = vadd.f32 %v1476, %v1525
    %v1527 = vpop.f32.mrb[0].mxu0
    %v1528 = vpop.f32.mrb[0].mxu0
    %1529 = vdwg.mxu0
    %1530 = vst [vmem:[#allocation2] sm:$0xff] %v1524
    %1531 = vst [vmem:[#allocation2 + $0x8] sm:$0xff] %v1526
    // Predicated region
    $region30: #{tpu_custom_call.1} parent=1 // pred_check
      _
    $region31: #{tpu_custom_call.1} parent=1 // pred_check_branch
      %1533 = sbr.rel (0) target = $region33
    $region32: #{tpu_custom_call.1} parent=1 // pred_region
      %s1535 = ssub.s32 256, 256
      %1536 = vsyncadd [#allocation3], %s1535
      %s1538 = sshll.u32 [#allocation2], 4
      %s1539 = int_to_ptr.vmem [resolvable:$true] %s1538
      %1541 = dma.vmem_to_hbm [thread:$0]  %s1539, 256, %s7, [#allocation3]
    $region33: #{tpu_custom_call.1} parent=1 // pred_fallthru
      _
    // Predicated region
    $region34: #{tpu_custom_call.1} parent=1 // pred_check
      _
    $region35: #{tpu_custom_call.1} parent=1 // pred_check_branch
      %1543 = sbr.rel (0) target = $region37
    $region36: #{tpu_custom_call.1} parent=1 // pred_region
      %1544 = dma.done [#allocation3], 256
    $region37: #{tpu_custom_call.1} parent=1 // pred_fallthru
      _
    %1545 = vsyncpa [#allocation3], 1

</llo_original>
